<compile_context>
chip_gen: v7x
topology: tpu7x:2x2x1
jax: 0.10.0
libtpu: 0.0.40
codegen_flags: <defaults>
</compile_context>

<pallas_src>
import functools

import jax
import jax.numpy as jnp
from jax.experimental import pallas as pl
from jax.experimental.pallas import tpu as pltpu

_LANES = 128


def _ceil_div(a, b):
    return -(-a // b)


# --------------------------------------------------------------------------
# Kernels
# --------------------------------------------------------------------------
def _layernorm_rows_kernel(x_ref, w_ref, b_ref, o_ref):
    # Generic path: one normalized group per row; block = (TILE_ROWS, C).
    x = x_ref[...].astype(jnp.float32)
    inv_c = jnp.float32(1.0 / x_ref.shape[-1])
    mu = jnp.sum(x, axis=-1, keepdims=True) * inv_c
    xc = x - mu
    var = jnp.sum(xc * xc, axis=-1, keepdims=True) * inv_c  # biased variance
    y = xc * jax.lax.rsqrt(var + 1e-5)
    y = y * w_ref[...].astype(jnp.float32) + b_ref[...].astype(jnp.float32)
    o_ref[...] = y.astype(o_ref.dtype)


def _layernorm_packed_kernel(x_ref, w_ref, b_ref, seg_ref, o_ref, *, inv_c):
    # Lane-dense path: block = (TILE_ROWS, 128); every 128-lane row packs
    # G = 128 // C original rows.  seg_ref is a (128, 128) block-diagonal ones
    # matrix: x @ seg gives every lane the sum over its own C-wide segment
    # (segmented reduce + broadcast in a single MXU op; the MXU is idle here).
    # Precision.HIGHEST keeps the f32 sums accurate (multi-pass bf16 matmul).
    x = x_ref[...].astype(jnp.float32)
    seg = seg_ref[...]
    inv_c = jnp.float32(inv_c)
    dot = functools.partial(jnp.dot,
                            precision=jax.lax.Precision.HIGHEST,
                            preferred_element_type=jnp.float32)
    mu = dot(x, seg) * inv_c
    xc = x - mu
    var = dot(xc * xc, seg) * inv_c                          # biased variance
    y = xc * jax.lax.rsqrt(var + 1e-5)
    y = y * w_ref[...].astype(jnp.float32) + b_ref[...].astype(jnp.float32)
    o_ref[...] = y.astype(o_ref.dtype)


# --------------------------------------------------------------------------
# Tile sizing / VMEM budgeting
# --------------------------------------------------------------------------
def _vmem_capacity_bytes():
    try:
        return int(pltpu.get_tpu_info().vmem_capacity_bytes)
    except Exception:
        return 64 << 20  # conservative default (v7x-sized VMEM)


def _block_params():
    cap = _vmem_capacity_bytes()
    if cap >= (100 << 20):           # v5e / v6e: 128 MiB physical VMEM
        return 6 << 20, 56 << 20     # (target block bytes, block VMEM budget)
    return 4 << 20, 28 << 20         # v7x: 64 MiB physical VMEM


def _choose_tile_rows(n_rows, width, itemsize):
    target_block_bytes, budget_bytes = _block_params()
    sub = max(8, 32 // itemsize)                 # sublane multiple: f32=8, bf16=16, i8=32
    # Rows so the streamed input block is ~target_block_bytes.
    tr = max(sub, target_block_bytes // (width * itemsize))
    # Cap aggregate VMEM: 2x in + 2x out double buffers + ~3 f32 temp copies.
    per_row = width * (4 * itemsize + 12)
    tr = min(tr, max(sub, budget_bytes // per_row))
    # Keep >= ~8 grid blocks when possible (>=4 per v7x TensorCore) so the
    # pipeline prologue/epilogue is hidden and megacore has balanced work.
    eighth = _ceil_div(_ceil_div(n_rows, 8), sub) * sub
    tr = min(tr, max(sub, eighth))
    tr = max(sub, (tr // sub) * sub)             # round to sublane multiple
    return int(min(tr, _ceil_div(n_rows, sub) * sub))


def _vmem_limit_bytes(tile_rows, width, itemsize):
    block_elems = tile_rows * width
    need = block_elems * (4 * itemsize + 12)     # same footprint model as above
    need += (_LANES * _LANES + 4 * width) * 4    # segment matrix + params
    return int(need + (8 << 20))                 # compiler scratch headroom


# --------------------------------------------------------------------------
# Wrapper
# --------------------------------------------------------------------------
@jax.jit
def with_bias_layernorm(x, weight, bias):
    """x: (..., C); weight, bias: (C,). Returns same shape/dtype as x."""
    orig_shape = x.shape
    C = orig_shape[-1]
    assert weight.shape == (C,) and bias.shape == (C,)

    x2 = x.reshape(-1, C)
    N = x2.shape[0]
    itemsize = x2.dtype.itemsize

    G = _LANES // C if (C < _LANES and _LANES % C == 0) else 0
    use_packed = G > 1 and N % G == 0

    if use_packed:
        # Lane-dense packing: (N, C) -> (N // G, 128) is a free row-major reshape.
        width = _LANES
        rows = N // G
        xp = x2.reshape(rows, width)
        wp = jnp.tile(weight, G).reshape(1, width)
        bp = jnp.tile(bias, G).reshape(1, width)
        lane_seg = jnp.arange(width, dtype=jnp.int32) // C
        seg = (lane_seg[:, None] == lane_seg[None, :]).astype(jnp.float32)

        tile_rows = _choose_tile_rows(rows, width, itemsize)
        grid = (_ceil_div(rows, tile_rows),)
        kernel = functools.partial(_layernorm_packed_kernel, inv_c=1.0 / C)
        cost = pl.CostEstimate(
            flops=12 * N * C + 4 * rows * width * width,
            transcendentals=N,
            bytes_accessed=2 * N * C * itemsize + 2 * C * itemsize,
        )

        out = pl.pallas_call(
            kernel,
            out_shape=jax.ShapeDtypeStruct((rows, width), x.dtype),
            grid_spec=pltpu.PrefetchScalarGridSpec(
                num_scalar_prefetch=0,
                grid=grid,
                in_specs=[
                    pl.BlockSpec((tile_rows, width), lambda i: (i, 0)),
                    pl.BlockSpec((1, width), lambda i: (0, 0)),
                    pl.BlockSpec((1, width), lambda i: (0, 0)),
                    pl.BlockSpec((width, width), lambda i: (0, 0)),
                ],
                out_specs=pl.BlockSpec((tile_rows, width), lambda i: (i, 0)),
            ),
            compiler_params=pltpu.CompilerParams(
                dimension_semantics=("parallel",),
                vmem_limit_bytes=_vmem_limit_bytes(tile_rows, width, itemsize),
            ),
            cost_estimate=cost,
        )(xp, wp, bp, seg)
        return out.reshape(orig_shape)

    # Generic path (C >= 128 or packing constraints not met): full-row blocks.
    tile_rows = _choose_tile_rows(N, C, itemsize)
    grid = (_ceil_div(N, tile_rows),)
    cost = pl.CostEstimate(
        flops=12 * N * C,
        transcendentals=N,
        bytes_accessed=2 * N * C * itemsize + 2 * C * itemsize,
    )
    out = pl.pallas_call(
        _layernorm_rows_kernel,
        out_shape=jax.ShapeDtypeStruct((N, C), x.dtype),
        grid_spec=pltpu.PrefetchScalarGridSpec(
            num_scalar_prefetch=0,
            grid=grid,
            in_specs=[
                pl.BlockSpec((tile_rows, C), lambda i: (i, 0)),
                pl.BlockSpec((1, C), lambda i: (0, 0)),
                pl.BlockSpec((1, C), lambda i: (0, 0)),
            ],
            out_specs=pl.BlockSpec((tile_rows, C), lambda i: (i, 0)),
        ),
        compiler_params=pltpu.CompilerParams(
            dimension_semantics=("parallel",),
            vmem_limit_bytes=_vmem_limit_bytes(tile_rows, C, itemsize),
        ),
        cost_estimate=cost,
    )(x2, weight.reshape(1, C), bias.reshape(1, C))
    return out.reshape(orig_shape)


def _reference(x, weight, bias):
    mu = jnp.mean(x, axis=-1, keepdims=True)
    sigma = jnp.mean((x - mu) ** 2, axis=-1, keepdims=True)
    return (x - mu) / jnp.sqrt(sigma + 1e-5) * weight + bias


if __name__ == "__main__":
    key = jax.random.PRNGKey(0)
    # Small shapes consistent with the module (tokens x channels, channels-last).
    B, L, C = 2, 64, 32
    x = jax.random.normal(key, (B, L, C), dtype=jnp.float32)
    weight = jnp.ones((C,), dtype=jnp.float32)   # nn.Parameter(torch.ones)
    bias = jnp.zeros((C,), dtype=jnp.float32)    # nn.Parameter(torch.zeros)

    out = jax.block_until_ready(with_bias_layernorm(x, weight, bias))
    ref = _reference(x, weight, bias)
    assert out.shape == x.shape and out.dtype == x.dtype
    assert jnp.allclose(out, ref, atol=1e-4, rtol=1e-4), \
        float(jnp.max(jnp.abs(out - ref)))

    # Also exercise the generic (C >= 128) path, including a partial last block.
    C2 = 128
    x2 = jax.random.normal(jax.random.PRNGKey(1), (3, 5, C2), dtype=jnp.float32)
    w2 = jax.random.normal(jax.random.PRNGKey(2), (C2,), dtype=jnp.float32)
    b2 = jax.random.normal(jax.random.PRNGKey(3), (C2,), dtype=jnp.float32)
    out2 = jax.block_until_ready(with_bias_layernorm(x2, w2, b2))
    ref2 = _reference(x2, w2, b2)
    assert jnp.allclose(out2, ref2, atol=1e-4, rtol=1e-4), \
        float(jnp.max(jnp.abs(out2 - ref2)))

    print("KERNEL_OK")
</pallas_src>

<mosaic_0001>
module attributes {stable_mosaic.version = 11 : i64} {
  func.func @_layernorm_packed_kernel(%arg0: i32, %arg1: memref<8x128xf32, #tpu.memory_space<vmem>>, %arg2: memref<1x128xf32, #tpu.memory_space<vmem>>, %arg3: memref<1x128xf32, #tpu.memory_space<vmem>>, %arg4: memref<128x128xf32, #tpu.memory_space<vmem>>, %arg5: memref<8x128xf32, #tpu.memory_space<vmem>>) attributes {dimension_semantics = [#tpu.dimension_semantics<parallel>], iteration_bounds = array<i64: 4>, scalar_prefetch = 0 : i64, scratch_operands = 0 : i64, tpu.core_type = #tpu.core_type<tc>, window_params = [{transform_indices = @transform_0, window_bounds = array<i64: 8, 128>}, {pipeline_mode = #tpu.pipeline_mode<synchronous>, transform_indices = @transform_1, window_bounds = array<i64: 1, 128>}, {pipeline_mode = #tpu.pipeline_mode<synchronous>, transform_indices = @transform_2, window_bounds = array<i64: 1, 128>}, {pipeline_mode = #tpu.pipeline_mode<synchronous>, transform_indices = @transform_3, window_bounds = array<i64: 128, 128>}, {transform_indices = @transform_4, window_bounds = array<i64: 8, 128>}]} {
    %c0 = arith.constant 0 : index
    %c0_0 = arith.constant 0 : index
    %0 = vector.load %arg1[%c0, %c0_0] : memref<8x128xf32, #tpu.memory_space<vmem>>, vector<8x128xf32>
    %c0_1 = arith.constant 0 : index
    %c0_2 = arith.constant 0 : index
    %1 = vector.load %arg4[%c0_1, %c0_2] : memref<128x128xf32, #tpu.memory_space<vmem>>, vector<128x128xf32>
    %cst = arith.constant dense<0.000000e+00> : vector<8x128xf32>
    %2 = tpu.matmul %0, %1, %cst {dimension_numbers = #tpu.dot_dimension_numbers<[1], [0], [0], [1], [0, 0, 1, 1], [], []>, precision = #tpu.contract_precision<fp32>} : vector<8x128xf32>, vector<128x128xf32>, vector<8x128xf32> -> vector<8x128xf32>
    %cst_3 = arith.constant 3.125000e-02 : f32
    %3 = vector.broadcast %cst_3 : f32 to vector<8x128xf32>
    %4 = arith.mulf %2, %3 : vector<8x128xf32>
    %5 = arith.subf %0, %4 : vector<8x128xf32>
    %6 = arith.mulf %5, %5 : vector<8x128xf32>
    %cst_4 = arith.constant dense<0.000000e+00> : vector<8x128xf32>
    %7 = tpu.matmul %6, %1, %cst_4 {dimension_numbers = #tpu.dot_dimension_numbers<[1], [0], [0], [1], [0, 0, 1, 1], [], []>, precision = #tpu.contract_precision<fp32>} : vector<8x128xf32>, vector<128x128xf32>, vector<8x128xf32> -> vector<8x128xf32>
    %cst_5 = arith.constant 3.125000e-02 : f32
    %8 = vector.broadcast %cst_5 : f32 to vector<8x128xf32>
    %9 = arith.mulf %7, %8 : vector<8x128xf32>
    %cst_6 = arith.constant 9.99999974E-6 : f32
    %10 = vector.broadcast %cst_6 : f32 to vector<8x128xf32>
    %11 = arith.addf %9, %10 : vector<8x128xf32>
    %12 = math.rsqrt %11 : vector<8x128xf32>
    %13 = arith.mulf %5, %12 : vector<8x128xf32>
    %c0_7 = arith.constant 0 : index
    %c0_8 = arith.constant 0 : index
    %14 = vector.load %arg2[%c0_7, %c0_8] : memref<1x128xf32, #tpu.memory_space<vmem>>, vector<1x128xf32>
    %15 = vector.broadcast %14 : vector<1x128xf32> to vector<8x128xf32>
    %16 = arith.mulf %13, %15 : vector<8x128xf32>
    %c0_9 = arith.constant 0 : index
    %c0_10 = arith.constant 0 : index
    %17 = vector.load %arg3[%c0_9, %c0_10] : memref<1x128xf32, #tpu.memory_space<vmem>>, vector<1x128xf32>
    %18 = vector.broadcast %17 : vector<1x128xf32> to vector<8x128xf32>
    %19 = arith.addf %16, %18 : vector<8x128xf32>
    %c0_11 = arith.constant 0 : index
    %c0_12 = arith.constant 0 : index
    %20 = vector.load %arg5[%c0_11, %c0_12] : memref<8x128xf32, #tpu.memory_space<vmem>>, vector<8x128xf32>
    tpu.vector_store %arg5[%c0_11, %c0_12], %19 {strides = array<i32>} : memref<8x128xf32, #tpu.memory_space<vmem>>, vector<8x128xf32>,
    return
  }
  func.func @transform_0(%arg0: i32) -> (i32, i32) {
    %c0_i32 = arith.constant 0 : i32
    %c0_i32_0 = arith.constant 0 : i32
    return %arg0, %c0_i32 : i32, i32
  }
  func.func @transform_1(%arg0: i32) -> (i32, i32) {
    %c0_i32 = arith.constant 0 : i32
    %c0_i32_0 = arith.constant 0 : i32
    %c0_i32_1 = arith.constant 0 : i32
    return %c0_i32, %c0_i32_0 : i32, i32
  }
  func.func @transform_2(%arg0: i32) -> (i32, i32) {
    %c0_i32 = arith.constant 0 : i32
    %c0_i32_0 = arith.constant 0 : i32
    %c0_i32_1 = arith.constant 0 : i32
    return %c0_i32, %c0_i32_0 : i32, i32
  }
  func.func @transform_3(%arg0: i32) -> (i32, i32) {
    %c0_i32 = arith.constant 0 : i32
    %c0_i32_0 = arith.constant 0 : i32
    %c0_i32_1 = arith.constant 0 : i32
    return %c0_i32, %c0_i32_0 : i32, i32
  }
  func.func @transform_4(%arg0: i32) -> (i32, i32) {
    %c0_i32 = arith.constant 0 : i32
    %c0_i32_0 = arith.constant 0 : i32
    return %arg0, %c0_i32 : i32, i32
  }
}

</mosaic_0001>

<llo_original>
// kernel: tile.13
$region0: #{tile.13}
  #allocation0 [shape = 's32[1]{0}', space=sflag, size = 0x4, scoped, tag = 'scoped memory for tile.13']
  %s0 = inlined_call_operand.vmem [shape: f32[32], index: 0, kind: input, shape index: {}]
  %s1 = inlined_call_operand.vmem [shape: f32[4,32], index: 1, kind: output, shape index: {}]
  // Predicated region
  $region2: #{tile.13} parent=0 // pred_check
    _
  $region3: #{tile.13} parent=0 // pred_check_branch
    %3 = sbr.rel (0) target = $region5
  $region4: #{tile.13} parent=0 // pred_region
    _
  $region5: #{tile.13} parent=0 // pred_fallthru
    _
  %v4 = vld [vmem:[%s0] ss:$0 sm:$0xff]
  %5 = vst [vmem:[%s1] sm:$0xf] %v4

// kernel: tile.14
$region0: #{tile.14}
  %s0 = inlined_call_operand.vmem [shape: f32[4,32], index: 0, kind: input, shape index: {}]
  %s1 = inlined_call_operand.vmem [shape: f32[1,128], index: 1, kind: output, shape index: {}]
  $region1: #{tile.14} parent=0
    #allocation0 [shape = 'u8[4096]{0}', space=vmem, size = 0x1000, scoped, tag = 'scoped mem for output reshape']
    #allocation1 [shape = 'u8[4096]{0}', space=vmem, size = 0x1000, scoped, tag = 'scoped mem for input reshape']
    %s3 = sshllo.u32 0, 4
    %v4 = vld [vmem:[%s0] sm:%s3]
    %5 = vst [vmem:[#allocation1] sm:%s3] %v4
    %v6 = vld [vmem:[#allocation1] sm:$0x1]
    %vm7 = vcmask 261120
    %8 = vst.msk [vmem:[#allocation0] sm:$0x1] %vm7, %v6
    %s9 = scalar_lea.vmem [#allocation1], 3
    %v10 = vld [vmem:[%s9] sm:$0x1]
    %11 = vrot.lane.b32.xlu0 %v10, 96
    %v12 = vpop.permute.xlu0 %11
    %vm13 = vcmask 1048320
    %14 = vst.msk [vmem:[#allocation0] sm:$0x1] %vm13, %v12
    %s15 = scalar_lea.vmem [#allocation1], 2
    %v16 = vld [vmem:[%s15] sm:$0x1]
    %17 = vrot.lane.b32.xlu0 %v16, 64
    %v18 = vpop.permute.xlu0 %17
    %vm19 = vcmask 785920
    %20 = vst.msk [vmem:[#allocation0] sm:$0x1] %vm19, %v18
    %s21 = scalar_lea.vmem [#allocation1], 1
    %v22 = vld [vmem:[%s21] sm:$0x1]
    %23 = vrot.lane.b32.xlu0 %v22, 32
    %v24 = vpop.permute.xlu0 %23
    %vm25 = vcmask 523520
    %26 = vst.msk [vmem:[#allocation0] sm:$0x1] %vm25, %v24
    %s28 = sshllo.u32 0, 1
    %v30 = vld [vmem:[#allocation0] sm:%s28]
    %s31 = sshllo.u32 0, 1
    %32 = vst [vmem:[%s1] sm:%s31] %v30

// kernel: with_bias_layernorm.1
$region0: #{with_bias_layernorm.1}
  #allocation0 [shape = 'u32[]', space=smem, size = 0x4, offset = 0x4, fixed_abs, tag = 'smem constant byte address 0x4 - core index']
  #allocation1 [shape = 'u32[144,128]{1,0:T(1,128)}', space=vmem, size = 0x12000, scoped, tag = 'internal scratch']
  %s0 = inlined_call_operand.vmem [shape: f32[32,128], index: 0, kind: input, shape index: {}]
  %s1 = inlined_call_operand.vmem [shape: f32[1,128], index: 1, kind: input, shape index: {}]
  %s2 = inlined_call_operand.vmem [shape: f32[1,128], index: 2, kind: input, shape index: {}]
  %s3 = inlined_call_operand.vmem [shape: f32[128,128], index: 3, kind: input, shape index: {}]
  %s4 = inlined_call_operand.vmem [shape: f32[32,128], index: 4, kind: output, shape index: {}]
  %s5 = sld [smem:[#allocation0]]
  $region49: #{with_bias_layernorm.1} parent=0
    _
  %s7 = ssub.s32 1, %s5
  %s8 = scalar_select 0, %s7, %s5
  loop: start=0, step=1, limit=6
  $region2: #{with_bias_layernorm.1} parent=0 // loop_pre_header
    _
  $region3: #{with_bias_layernorm.1} parent=0 // loop_header
    %s10 = sphi 0, %s14
    %p11 = scmp.ge.s32.totalorder %s10, 6
    %s20 = sphi 0, %s22
    %s23 = sphi 0, %s20
    %s24 = sphi 0, %s23
    %s40 = sphi 0, %s24
    %s44 = sphi 0, %s44
    %s46 = sphi 0, %s44
    %s47 = sphi 0, %s46
    %s61 = sphi 0, %s47
    %s65 = sphi 0, %s65
    %s67 = sphi 0, %s65
    %s68 = sphi 0, %s67
    %s82 = sphi 0, %s68
    %s86 = sphi 0, %s86
    %s88 = sphi 0, %s86
    %s89 = sphi 0, %s88
    %s103 = sphi 0, %s89
    %s109 = sphi 0, %s111
    %s112 = sphi 0, %s109
    %s113 = sphi 0, %s112
    %s129 = sphi 0, %s113
  $region4: #{with_bias_layernorm.1} parent=0 // loop_header_branch
    %13 = sbr.rel (%p11) target = $region8
  $region5: #{with_bias_layernorm.1} parent=0 // loop_body
    %s15 = ssub.s32 %s10, 1
    %s16 = ssub.s32 %s10, 2
    %s17 = sadd.s32 %s10, 1
    %s18 = ssub.s32 %s10, %s17
    %p19 = scmp.eq.s32.totalorder %s18, 0
    %s21 = sadd.s32 %s20, 1
    %s22 = scalar_select %p19, %s20, %s21
    %p25 = pneg %p19
    %p26 = scmp.eq.s32.totalorder %s10, 3
    %p27 = por %p25, %p26
    %p28 = scmp.ne.s32.totalorder %s20, %s23
    %p29 = scmp.eq.s32.totalorder %s10, 0
    %p30 = por %p28, %p29
    %p31 = scmp.ne.s32.totalorder %s20, %s23
    %p32 = scmp.eq.s32.totalorder %s15, 3
    %p33 = por %p31, %p32
    %p34 = scmp.ne.s32.totalorder %s23, %s24
    %p35 = scmp.eq.s32.totalorder %s15, 0
    %p36 = por %p34, %p35
    %p37 = scmp.ne.s32.totalorder %s23, %s24
    %p38 = scmp.eq.s32.totalorder %s16, 3
    %p39 = por %p37, %p38
    %p41 = scmp.ne.s32.totalorder %s24, %s40
    %p42 = scmp.eq.s32.totalorder %s16, 0
    %p43 = por %p41, %p42
    %s45 = sadd.s32 %s44, 1
    %p48 = scmp.eq.s32.totalorder %s10, 3
    %p49 = scmp.ne.s32.totalorder %s44, %s46
    %p50 = scmp.eq.s32.totalorder %s10, 0
    %p51 = por %p49, %p50
    %p52 = scmp.ne.s32.totalorder %s44, %s46
    %p53 = scmp.eq.s32.totalorder %s15, 3
    %p54 = por %p52, %p53
    %p55 = scmp.ne.s32.totalorder %s46, %s47
    %p56 = scmp.eq.s32.totalorder %s15, 0
    %p57 = por %p55, %p56
    %p58 = scmp.ne.s32.totalorder %s46, %s47
    %p59 = scmp.eq.s32.totalorder %s16, 3
    %p60 = por %p58, %p59
    %p62 = scmp.ne.s32.totalorder %s47, %s61
    %p63 = scmp.eq.s32.totalorder %s16, 0
    %p64 = por %p62, %p63
    %s66 = sadd.s32 %s65, 1
    %p69 = scmp.eq.s32.totalorder %s10, 3
    %p70 = scmp.ne.s32.totalorder %s65, %s67
    %p71 = scmp.eq.s32.totalorder %s10, 0
    %p72 = por %p70, %p71
    %p73 = scmp.ne.s32.totalorder %s65, %s67
    %p74 = scmp.eq.s32.totalorder %s15, 3
    %p75 = por %p73, %p74
    %p76 = scmp.ne.s32.totalorder %s67, %s68
    %p77 = scmp.eq.s32.totalorder %s15, 0
    %p78 = por %p76, %p77
    %p79 = scmp.ne.s32.totalorder %s67, %s68
    %p80 = scmp.eq.s32.totalorder %s16, 3
    %p81 = por %p79, %p80
    %p83 = scmp.ne.s32.totalorder %s68, %s82
    %p84 = scmp.eq.s32.totalorder %s16, 0
    %p85 = por %p83, %p84
    %s87 = sadd.s32 %s86, 1
    %p90 = scmp.eq.s32.totalorder %s10, 3
    %p91 = scmp.ne.s32.totalorder %s86, %s88
    %p92 = scmp.eq.s32.totalorder %s10, 0
    %p93 = por %p91, %p92
    %p94 = scmp.ne.s32.totalorder %s86, %s88
    %p95 = scmp.eq.s32.totalorder %s15, 3
    %p96 = por %p94, %p95
    %p97 = scmp.ne.s32.totalorder %s88, %s89
    %p98 = scmp.eq.s32.totalorder %s15, 0
    %p99 = por %p97, %p98
    %p100 = scmp.ne.s32.totalorder %s88, %s89
    %p101 = scmp.eq.s32.totalorder %s16, 3
    %p102 = por %p100, %p101
    %p104 = scmp.ne.s32.totalorder %s89, %s103
    %p105 = scmp.eq.s32.totalorder %s16, 0
    %p106 = por %p104, %p105
    %s107 = ssub.s32 %s10, %s17
    %p108 = scmp.eq.s32.totalorder %s107, 0
    %s110 = sadd.s32 %s109, 1
    %s111 = scalar_select %p108, %s109, %s110
    %p114 = pneg %p108
    %p115 = scmp.eq.s32.totalorder %s10, 3
    %p116 = por %p114, %p115
    %p117 = scmp.ne.s32.totalorder %s109, %s112
    %p118 = scmp.eq.s32.totalorder %s10, 0
    %p119 = por %p117, %p118
    %p120 = scmp.ne.s32.totalorder %s109, %s112
    %p121 = scmp.eq.s32.totalorder %s15, 3
    %p122 = por %p120, %p121
    %p123 = scmp.ne.s32.totalorder %s112, %s113
    %p124 = scmp.eq.s32.totalorder %s15, 0
    %p125 = por %p123, %p124
    %p126 = scmp.ne.s32.totalorder %s112, %s113
    %p127 = scmp.eq.s32.totalorder %s16, 3
    %p128 = por %p126, %p127
    %p130 = scmp.ne.s32.totalorder %s113, %s129
    %p131 = scmp.eq.s32.totalorder %s16, 0
    %p132 = por %p130, %p131
    %p133 = scmp.le.s32.totalorder 1, %s10
    %p134 = scmp.lt.s32.totalorder %s10, 5
    %p135 = pnand %p133, %p134
    %p136 = pneg %p135
    // Predicated region
    $region9: #{with_bias_layernorm.1} parent=5 // pred_check
      _
    $region10: #{with_bias_layernorm.1} parent=5 // pred_check_branch
      %138 = sbr.rel (%p135) target = $region12
    $region11: #{with_bias_layernorm.1} parent=5 // pred_region
      %s139 = ssub.s32 %s10, 1
      // Predicated region
      $region13: #{with_bias_layernorm.1} parent=11 // pred_check
        %p140 = pneg %p57
      $region14: #{with_bias_layernorm.1} parent=11 // pred_check_branch
        %142 = sbr.rel (%p140) target = $region16
      $region15: #{with_bias_layernorm.1} parent=11 // pred_region
        _
      $region16: #{with_bias_layernorm.1} parent=11 // pred_fallthru
        _
      // Predicated region
      $region17: #{with_bias_layernorm.1} parent=11 // pred_check
        %p143 = pneg %p78
      $region18: #{with_bias_layernorm.1} parent=11 // pred_check_branch
        %145 = sbr.rel (%p143) target = $region20
      $region19: #{with_bias_layernorm.1} parent=11 // pred_region
        _
      $region20: #{with_bias_layernorm.1} parent=11 // pred_fallthru
        _
      // Predicated region
      $region21: #{with_bias_layernorm.1} parent=11 // pred_check
        %p146 = pneg %p99
      $region22: #{with_bias_layernorm.1} parent=11 // pred_check_branch
        %148 = sbr.rel (%p146) target = $region24
      $region23: #{with_bias_layernorm.1} parent=11 // pred_region
        _
      $region24: #{with_bias_layernorm.1} parent=11 // pred_fallthru
        _
    $region12: #{with_bias_layernorm.1} parent=5 // pred_fallthru
      _
    %p149 = scmp.lt.s32.totalorder %s10, 4
    // Predicated region
    $region25: #{with_bias_layernorm.1} parent=5 // pred_check
      %p150 = pneg %p149
    $region26: #{with_bias_layernorm.1} parent=5 // pred_check_branch
      %152 = sbr.rel (%p150) target = $region28
    $region27: #{with_bias_layernorm.1} parent=5 // pred_region
      // Predicated region
      $region29: #{with_bias_layernorm.1} parent=27 // pred_check
        %p153 = pneg %p30
      $region30: #{with_bias_layernorm.1} parent=27 // pred_check_branch
        %155 = sbr.rel (%p153) target = $region32
      $region31: #{with_bias_layernorm.1} parent=27 // pred_region
        %p156 = scmp.lt.s32.totalorder %s10, 3
        %s157 = scalar_select %p156, %s10, 3
        %s158 = smul.addr %s157, 8
        %s159 = scalar_lea.vmem %s0, %s158
      $region32: #{with_bias_layernorm.1} parent=27 // pred_fallthru
        _
    $region28: #{with_bias_layernorm.1} parent=5 // pred_fallthru
      _
    %p160 = scmp.le.s32.totalorder 1, %s10
    %p161 = scmp.lt.s32.totalorder %s10, 5
    %p162 = pnand %p160, %p161
    %p163 = pneg %p162
    // Predicated region
    $region33: #{with_bias_layernorm.1} parent=5 // pred_check
      _
    $region34: #{with_bias_layernorm.1} parent=5 // pred_check_branch
      %165 = sbr.rel (%p162) target = $region36
    $region35: #{with_bias_layernorm.1} parent=5 // pred_region
      %s166 = ssub.s32 %s10, 1
      %p167 = scmp.lt.s32.totalorder %s15, 3
      %s168 = scalar_select %p167, %s15, 3
      %s169 = smul.addr %s168, 8
      %s170 = scalar_lea.vmem %s0, %s169
      %p171 = pneg %p36
      %p172 = pneg %p33
      %p173 = pneg %p57
      %p174 = pneg %p54
      %p175 = pneg %p78
      %p176 = pneg %p75
      %p177 = pneg %p99
      %p178 = pneg %p96
      %p179 = pneg %p125
      %p180 = pneg %p122
      %p181 = scmp.lt.s32.totalorder %s15, 3
      %s182 = scalar_select %p181, %s15, 3
      %s183 = smul.addr %s182, 8
      %s184 = scalar_lea.vmem %s4, %s183
      %p185 = scmp.lt.s32.totalorder %s15, 3
      %s186 = scalar_select %p185, %s15, 3
      %s187 = smul.addr %s186, 8
      %s188 = scalar_lea.vmem %s0, %s187
      %p189 = scmp.lt.s32.totalorder %s15, 3
      %s190 = scalar_select %p189, %s15, 3
      %s191 = smul.addr %s190, 8
      %s192 = scalar_lea.vmem %s4, %s191
      %v193 = vld [vmem:[%s188] sm:$0xff]
      %v194 = vld [vmem:[%s3] sm:$0xff]
      %v195 = vld [vmem:[%s3 + $0x8] sm:$0xff]
      %v196 = vld [vmem:[%s3 + $0x10] sm:$0xff]
      %v197 = vld [vmem:[%s3 + $0x18] sm:$0xff]
      %v198 = vld [vmem:[%s3 + $0x20] sm:$0xff]
      %v199 = vld [vmem:[%s3 + $0x28] sm:$0xff]
      %v200 = vld [vmem:[%s3 + $0x30] sm:$0xff]
      %v201 = vld [vmem:[%s3 + $0x38] sm:$0xff]
      %v202 = vld [vmem:[%s3 + $0x40] sm:$0xff]
      %v203 = vld [vmem:[%s3 + $0x48] sm:$0xff]
      %v204 = vld [vmem:[%s3 + $0x50] sm:$0xff]
      %v205 = vld [vmem:[%s3 + $0x58] sm:$0xff]
      %v206 = vld [vmem:[%s3 + $0x60] sm:$0xff]
      %v207 = vld [vmem:[%s3 + $0x68] sm:$0xff]
      %v208 = vld [vmem:[%s3 + $0x70] sm:$0xff]
      %v209 = vld [vmem:[%s3 + $0x78] sm:$0xff]
      %210 = vmatprep.subr.mxu0 0.0
      %v211 = vand.u32 %v194, 4294901760
      %212 = vmatpush1.msra.mxu0 %v211
      %213 = vmatprep.subr.mxu0 0.0
      %v214 = vand.u32 %v195, 4294901760
      %215 = vmatpush1.msra.mxu0 %v214
      %216 = vmatprep.subr.mxu0 0.0
      %v217 = vand.u32 %v196, 4294901760
      %218 = vmatpush1.msra.mxu0 %v217
      %219 = vmatprep.subr.mxu0 0.0
      %v220 = vand.u32 %v197, 4294901760
      %221 = vmatpush1.msra.mxu0 %v220
      %222 = vmatprep.subr.mxu0 0.0
      %v223 = vand.u32 %v198, 4294901760
      %224 = vmatpush1.msra.mxu0 %v223
      %225 = vmatprep.subr.mxu0 0.0
      %v226 = vand.u32 %v199, 4294901760
      %227 = vmatpush1.msra.mxu0 %v226
      %228 = vmatprep.subr.mxu0 0.0
      %v229 = vand.u32 %v200, 4294901760
      %230 = vmatpush1.msra.mxu0 %v229
      %231 = vmatprep.subr.mxu0 0.0
      %v232 = vand.u32 %v201, 4294901760
      %233 = vmatpush1.msra.mxu0 %v232
      %234 = vmatprep.subr.mxu0 0.0
      %v235 = vand.u32 %v202, 4294901760
      %236 = vmatpush1.msra.mxu0 %v235
      %237 = vmatprep.subr.mxu0 0.0
      %v238 = vand.u32 %v203, 4294901760
      %239 = vmatpush1.msra.mxu0 %v238
      %240 = vmatprep.subr.mxu0 0.0
      %v241 = vand.u32 %v204, 4294901760
      %242 = vmatpush1.msra.mxu0 %v241
      %243 = vmatprep.subr.mxu0 0.0
      %v244 = vand.u32 %v205, 4294901760
      %245 = vmatpush1.msra.mxu0 %v244
      %246 = vmatprep.subr.mxu0 0.0
      %v247 = vand.u32 %v206, 4294901760
      %248 = vmatpush1.msra.mxu0 %v247
      %249 = vmatprep.subr.mxu0 0.0
      %v250 = vand.u32 %v207, 4294901760
      %251 = vmatpush1.msra.mxu0 %v250
      %252 = vmatprep.subr.mxu0 0.0
      %v253 = vand.u32 %v208, 4294901760
      %254 = vmatpush1.msra.mxu0 %v253
      %255 = vmatprep.subr.mxu0 0.0
      %v256 = vand.u32 %v209, 4294901760
      %257 = vmatpush1.msra.mxu0 %v256
      %258 = vmatprep.subr.mxu0 0.0
      %259 = vmatpush1.msra.mxu0 0.0
      %260 = vmatprep.subr.mxu0 0.0
      %261 = vmatpush1.msra.mxu0 0.0
      %262 = vmatprep.subr.mxu0 0.0
      %263 = vmatpush1.msra.mxu0 0.0
      %264 = vmatprep.subr.mxu0 0.0
      %265 = vmatpush1.msra.mxu0 0.0
      %266 = vmatprep.subr.mxu0 0.0
      %267 = vmatpush1.msra.mxu0 0.0
      %268 = vmatprep.subr.mxu0 0.0
      %269 = vmatpush1.msra.mxu0 0.0
      %270 = vmatprep.subr.mxu0 0.0
      %271 = vmatpush1.msra.mxu0 0.0
      %272 = vmatprep.subr.mxu0 0.0
      %273 = vmatpush1.msra.mxu0 0.0
      %274 = vmatprep.subr.mxu0 0.0
      %275 = vmatpush1.msra.mxu0 0.0
      %276 = vmatprep.subr.mxu0 0.0
      %277 = vmatpush1.msra.mxu0 0.0
      %278 = vmatprep.subr.mxu0 0.0
      %279 = vmatpush1.msra.mxu0 0.0
      %280 = vmatprep.subr.mxu0 0.0
      %281 = vmatpush1.msra.mxu0 0.0
      %282 = vmatprep.subr.mxu0 0.0
      %283 = vmatpush1.msra.mxu0 0.0
      %284 = vmatprep.subr.mxu0 0.0
      %285 = vmatpush1.msra.mxu0 0.0
      %286 = vmatprep.subr.mxu0 0.0
      %287 = vmatpush1.msra.mxu0 0.0
      %288 = vmatprep.subr.mxu0 0.0
      %289 = vmatpush1.msra.mxu0 0.0
      %290 = vmatprep.mubr.f32.mxu0 0.0
      %v291 = vand.u32 %v193, 4294901760
      %v292 = vsub.f32 %v193, %v291
      %v293 = vand.u32 %v292, 4294901760
      %v294 = vsub.f32 %v292, %v293
      %v295 = vand.u32 %v294, 4294901760
      %296 = vmatmul.mubr.f32.gmra.mrb[0].mxu0 %v295
      %v297 = vpop.f32.mrb[0].mxu0
      %v298 = vadd.f32 0.0, %v297
      %v299 = vpop.f32.mrb[0].mxu0
      %300 = vdwg.mxu0
      %301 = vmatprep.subr.mxu0 0.0
      %v302 = vand.u32 %v194, 4294901760
      %v303 = vsub.f32 %v194, %v302
      %v304 = vand.u32 %v303, 4294901760
      %v305 = vsub.f32 %v303, %v304
      %v306 = vand.u32 %v305, 4294901760
      %307 = vmatpush1.msra.mxu0 %v306
      %308 = vmatprep.subr.mxu0 0.0
      %v309 = vand.u32 %v195, 4294901760
      %v310 = vsub.f32 %v195, %v309
      %v311 = vand.u32 %v310, 4294901760
      %v312 = vsub.f32 %v310, %v311
      %v313 = vand.u32 %v312, 4294901760
      %314 = vmatpush1.msra.mxu0 %v313
      %315 = vmatprep.subr.mxu0 0.0
      %v316 = vand.u32 %v196, 4294901760
      %v317 = vsub.f32 %v196, %v316
      %v318 = vand.u32 %v317, 4294901760
      %v319 = vsub.f32 %v317, %v318
      %v320 = vand.u32 %v319, 4294901760
      %321 = vmatpush1.msra.mxu0 %v320
      %322 = vmatprep.subr.mxu0 0.0
      %v323 = vand.u32 %v197, 4294901760
      %v324 = vsub.f32 %v197, %v323
      %v325 = vand.u32 %v324, 4294901760
      %v326 = vsub.f32 %v324, %v325
      %v327 = vand.u32 %v326, 4294901760
      %328 = vmatpush1.msra.mxu0 %v327
      %329 = vmatprep.subr.mxu0 0.0
      %v330 = vand.u32 %v198, 4294901760
      %v331 = vsub.f32 %v198, %v330
      %v332 = vand.u32 %v331, 4294901760
      %v333 = vsub.f32 %v331, %v332
      %v334 = vand.u32 %v333, 4294901760
      %335 = vmatpush1.msra.mxu0 %v334
      %336 = vmatprep.subr.mxu0 0.0
      %v337 = vand.u32 %v199, 4294901760
      %v338 = vsub.f32 %v199, %v337
      %v339 = vand.u32 %v338, 4294901760
      %v340 = vsub.f32 %v338, %v339
      %v341 = vand.u32 %v340, 4294901760
      %342 = vmatpush1.msra.mxu0 %v341
      %343 = vmatprep.subr.mxu0 0.0
      %v344 = vand.u32 %v200, 4294901760
      %v345 = vsub.f32 %v200, %v344
      %v346 = vand.u32 %v345, 4294901760
      %v347 = vsub.f32 %v345, %v346
      %v348 = vand.u32 %v347, 4294901760
      %349 = vmatpush1.msra.mxu0 %v348
      %350 = vmatprep.subr.mxu0 0.0
      %v351 = vand.u32 %v201, 4294901760
      %v352 = vsub.f32 %v201, %v351
      %v353 = vand.u32 %v352, 4294901760
      %v354 = vsub.f32 %v352, %v353
      %v355 = vand.u32 %v354, 4294901760
      %356 = vmatpush1.msra.mxu0 %v355
      %357 = vmatprep.subr.mxu0 0.0
      %v358 = vand.u32 %v202, 4294901760
      %v359 = vsub.f32 %v202, %v358
      %v360 = vand.u32 %v359, 4294901760
      %v361 = vsub.f32 %v359, %v360
      %v362 = vand.u32 %v361, 4294901760
      %363 = vmatpush1.msra.mxu0 %v362
      %364 = vmatprep.subr.mxu0 0.0
      %v365 = vand.u32 %v203, 4294901760
      %v366 = vsub.f32 %v203, %v365
      %v367 = vand.u32 %v366, 4294901760
      %v368 = vsub.f32 %v366, %v367
      %v369 = vand.u32 %v368, 4294901760
      %370 = vmatpush1.msra.mxu0 %v369
      %371 = vmatprep.subr.mxu0 0.0
      %v372 = vand.u32 %v204, 4294901760
      %v373 = vsub.f32 %v204, %v372
      %v374 = vand.u32 %v373, 4294901760
      %v375 = vsub.f32 %v373, %v374
      %v376 = vand.u32 %v375, 4294901760
      %377 = vmatpush1.msra.mxu0 %v376
      %378 = vmatprep.subr.mxu0 0.0
      %v379 = vand.u32 %v205, 4294901760
      %v380 = vsub.f32 %v205, %v379
      %v381 = vand.u32 %v380, 4294901760
      %v382 = vsub.f32 %v380, %v381
      %v383 = vand.u32 %v382, 4294901760
      %384 = vmatpush1.msra.mxu0 %v383
      %385 = vmatprep.subr.mxu0 0.0
      %v386 = vand.u32 %v206, 4294901760
      %v387 = vsub.f32 %v206, %v386
      %v388 = vand.u32 %v387, 4294901760
      %v389 = vsub.f32 %v387, %v388
      %v390 = vand.u32 %v389, 4294901760
      %391 = vmatpush1.msra.mxu0 %v390
      %392 = vmatprep.subr.mxu0 0.0
      %v393 = vand.u32 %v207, 4294901760
      %v394 = vsub.f32 %v207, %v393
      %v395 = vand.u32 %v394, 4294901760
      %v396 = vsub.f32 %v394, %v395
      %v397 = vand.u32 %v396, 4294901760
      %398 = vmatpush1.msra.mxu0 %v397
      %399 = vmatprep.subr.mxu0 0.0
      %v400 = vand.u32 %v208, 4294901760
      %v401 = vsub.f32 %v208, %v400
      %v402 = vand.u32 %v401, 4294901760
      %v403 = vsub.f32 %v401, %v402
      %v404 = vand.u32 %v403, 4294901760
      %405 = vmatpush1.msra.mxu0 %v404
      %406 = vmatprep.subr.mxu0 0.0
      %v407 = vand.u32 %v209, 4294901760
      %v408 = vsub.f32 %v209, %v407
      %v409 = vand.u32 %v408, 4294901760
      %v410 = vsub.f32 %v408, %v409
      %v411 = vand.u32 %v410, 4294901760
      %412 = vmatpush1.msra.mxu0 %v411
      %413 = vmatprep.subr.mxu0 0.0
      %414 = vmatpush1.msra.mxu0 0.0
      %415 = vmatprep.subr.mxu0 0.0
      %416 = vmatpush1.msra.mxu0 0.0
      %417 = vmatprep.subr.mxu0 0.0
      %418 = vmatpush1.msra.mxu0 0.0
      %419 = vmatprep.subr.mxu0 0.0
      %420 = vmatpush1.msra.mxu0 0.0
      %421 = vmatprep.subr.mxu0 0.0
      %422 = vmatpush1.msra.mxu0 0.0
      %423 = vmatprep.subr.mxu0 0.0
      %424 = vmatpush1.msra.mxu0 0.0
      %425 = vmatprep.subr.mxu0 0.0
      %426 = vmatpush1.msra.mxu0 0.0
      %427 = vmatprep.subr.mxu0 0.0
      %428 = vmatpush1.msra.mxu0 0.0
      %429 = vmatprep.subr.mxu0 0.0
      %430 = vmatpush1.msra.mxu0 0.0
      %431 = vmatprep.subr.mxu0 0.0
      %432 = vmatpush1.msra.mxu0 0.0
      %433 = vmatprep.subr.mxu0 0.0
      %434 = vmatpush1.msra.mxu0 0.0
      %435 = vmatprep.subr.mxu0 0.0
      %436 = vmatpush1.msra.mxu0 0.0
      %437 = vmatprep.subr.mxu0 0.0
      %438 = vmatpush1.msra.mxu0 0.0
      %439 = vmatprep.subr.mxu0 0.0
      %440 = vmatpush1.msra.mxu0 0.0
      %441 = vmatprep.subr.mxu0 0.0
      %442 = vmatpush1.msra.mxu0 0.0
      %443 = vmatprep.subr.mxu0 0.0
      %444 = vmatpush1.msra.mxu0 0.0
      %445 = vmatprep.mubr.f32.mxu0 0.0
      %v446 = vand.u32 %v193, 4294901760
      %447 = vmatmul.mubr.f32.gmra.mrb[0].mxu0 %v446
      %v448 = vpop.f32.mrb[0].mxu0
      %v449 = vadd.f32 %v298, %v448
      %v450 = vpop.f32.mrb[0].mxu0
      %451 = vdwg.mxu0
      %452 = vmatprep.subr.mxu0 0.0
      %v453 = vand.u32 %v194, 4294901760
      %v454 = vsub.f32 %v194, %v453
      %455 = vmatpush1.msra.mxu0 %v454
      %456 = vmatprep.subr.mxu0 0.0
      %v457 = vand.u32 %v195, 4294901760
      %v458 = vsub.f32 %v195, %v457
      %459 = vmatpush1.msra.mxu0 %v458
      %460 = vmatprep.subr.mxu0 0.0
      %v461 = vand.u32 %v196, 4294901760
      %v462 = vsub.f32 %v196, %v461
      %463 = vmatpush1.msra.mxu0 %v462
      %464 = vmatprep.subr.mxu0 0.0
      %v465 = vand.u32 %v197, 4294901760
      %v466 = vsub.f32 %v197, %v465
      %467 = vmatpush1.msra.mxu0 %v466
      %468 = vmatprep.subr.mxu0 0.0
      %v469 = vand.u32 %v198, 4294901760
      %v470 = vsub.f32 %v198, %v469
      %471 = vmatpush1.msra.mxu0 %v470
      %472 = vmatprep.subr.mxu0 0.0
      %v473 = vand.u32 %v199, 4294901760
      %v474 = vsub.f32 %v199, %v473
      %475 = vmatpush1.msra.mxu0 %v474
      %476 = vmatprep.subr.mxu0 0.0
      %v477 = vand.u32 %v200, 4294901760
      %v478 = vsub.f32 %v200, %v477
      %479 = vmatpush1.msra.mxu0 %v478
      %480 = vmatprep.subr.mxu0 0.0
      %v481 = vand.u32 %v201, 4294901760
      %v482 = vsub.f32 %v201, %v481
      %483 = vmatpush1.msra.mxu0 %v482
      %484 = vmatprep.subr.mxu0 0.0
      %v485 = vand.u32 %v202, 4294901760
      %v486 = vsub.f32 %v202, %v485
      %487 = vmatpush1.msra.mxu0 %v486
      %488 = vmatprep.subr.mxu0 0.0
      %v489 = vand.u32 %v203, 4294901760
      %v490 = vsub.f32 %v203, %v489
      %491 = vmatpush1.msra.mxu0 %v490
      %492 = vmatprep.subr.mxu0 0.0
      %v493 = vand.u32 %v204, 4294901760
      %v494 = vsub.f32 %v204, %v493
      %495 = vmatpush1.msra.mxu0 %v494
      %496 = vmatprep.subr.mxu0 0.0
      %v497 = vand.u32 %v205, 4294901760
      %v498 = vsub.f32 %v205, %v497
      %499 = vmatpush1.msra.mxu0 %v498
      %500 = vmatprep.subr.mxu0 0.0
      %v501 = vand.u32 %v206, 4294901760
      %v502 = vsub.f32 %v206, %v501
      %503 = vmatpush1.msra.mxu0 %v502
      %504 = vmatprep.subr.mxu0 0.0
      %v505 = vand.u32 %v207, 4294901760
      %v506 = vsub.f32 %v207, %v505
      %507 = vmatpush1.msra.mxu0 %v506
      %508 = vmatprep.subr.mxu0 0.0
      %v509 = vand.u32 %v208, 4294901760
      %v510 = vsub.f32 %v208, %v509
      %511 = vmatpush1.msra.mxu0 %v510
      %512 = vmatprep.subr.mxu0 0.0
      %v513 = vand.u32 %v209, 4294901760
      %v514 = vsub.f32 %v209, %v513
      %515 = vmatpush1.msra.mxu0 %v514
      %516 = vmatprep.subr.mxu0 0.0
      %517 = vmatpush1.msra.mxu0 0.0
      %518 = vmatprep.subr.mxu0 0.0
      %519 = vmatpush1.msra.mxu0 0.0
      %520 = vmatprep.subr.mxu0 0.0
      %521 = vmatpush1.msra.mxu0 0.0
      %522 = vmatprep.subr.mxu0 0.0
      %523 = vmatpush1.msra.mxu0 0.0
      %524 = vmatprep.subr.mxu0 0.0
      %525 = vmatpush1.msra.mxu0 0.0
      %526 = vmatprep.subr.mxu0 0.0
      %527 = vmatpush1.msra.mxu0 0.0
      %528 = vmatprep.subr.mxu0 0.0
      %529 = vmatpush1.msra.mxu0 0.0
      %530 = vmatprep.subr.mxu0 0.0
      %531 = vmatpush1.msra.mxu0 0.0
      %532 = vmatprep.subr.mxu0 0.0
      %533 = vmatpush1.msra.mxu0 0.0
      %534 = vmatprep.subr.mxu0 0.0
      %535 = vmatpush1.msra.mxu0 0.0
      %536 = vmatprep.subr.mxu0 0.0
      %537 = vmatpush1.msra.mxu0 0.0
      %538 = vmatprep.subr.mxu0 0.0
      %539 = vmatpush1.msra.mxu0 0.0
      %540 = vmatprep.subr.mxu0 0.0
      %541 = vmatpush1.msra.mxu0 0.0
      %542 = vmatprep.subr.mxu0 0.0
      %543 = vmatpush1.msra.mxu0 0.0
      %544 = vmatprep.subr.mxu0 0.0
      %545 = vmatpush1.msra.mxu0 0.0
      %546 = vmatprep.subr.mxu0 0.0
      %547 = vmatpush1.msra.mxu0 0.0
      %548 = vmatprep.mubr.f32.mxu0 0.0
      %v549 = vand.u32 %v193, 4294901760
      %v550 = vsub.f32 %v193, %v549
      %551 = vmatmul.mubr.f32.gmra.mrb[0].mxu0 %v550
      %v552 = vpop.f32.mrb[0].mxu0
      %v553 = vadd.f32 %v449, %v552
      %v554 = vpop.f32.mrb[0].mxu0
      %555 = vdwg.mxu0
      %556 = vmatprep.subr.mxu0 0.0
      %v557 = vand.u32 %v194, 4294901760
      %558 = vmatpush1.msra.mxu0 %v557
      %559 = vmatprep.subr.mxu0 0.0
      %v560 = vand.u32 %v195, 4294901760
      %561 = vmatpush1.msra.mxu0 %v560
      %562 = vmatprep.subr.mxu0 0.0
      %v563 = vand.u32 %v196, 4294901760
      %564 = vmatpush1.msra.mxu0 %v563
      %565 = vmatprep.subr.mxu0 0.0
      %v566 = vand.u32 %v197, 4294901760
      %567 = vmatpush1.msra.mxu0 %v566
      %568 = vmatprep.subr.mxu0 0.0
      %v569 = vand.u32 %v198, 4294901760
      %570 = vmatpush1.msra.mxu0 %v569
      %571 = vmatprep.subr.mxu0 0.0
      %v572 = vand.u32 %v199, 4294901760
      %573 = vmatpush1.msra.mxu0 %v572
      %574 = vmatprep.subr.mxu0 0.0
      %v575 = vand.u32 %v200, 4294901760
      %576 = vmatpush1.msra.mxu0 %v575
      %577 = vmatprep.subr.mxu0 0.0
      %v578 = vand.u32 %v201, 4294901760
      %579 = vmatpush1.msra.mxu0 %v578
      %580 = vmatprep.subr.mxu0 0.0
      %v581 = vand.u32 %v202, 4294901760
      %582 = vmatpush1.msra.mxu0 %v581
      %583 = vmatprep.subr.mxu0 0.0
      %v584 = vand.u32 %v203, 4294901760
      %585 = vmatpush1.msra.mxu0 %v584
      %586 = vmatprep.subr.mxu0 0.0
      %v587 = vand.u32 %v204, 4294901760
      %588 = vmatpush1.msra.mxu0 %v587
      %589 = vmatprep.subr.mxu0 0.0
      %v590 = vand.u32 %v205, 4294901760
      %591 = vmatpush1.msra.mxu0 %v590
      %592 = vmatprep.subr.mxu0 0.0
      %v593 = vand.u32 %v206, 4294901760
      %594 = vmatpush1.msra.mxu0 %v593
      %595 = vmatprep.subr.mxu0 0.0
      %v596 = vand.u32 %v207, 4294901760
      %597 = vmatpush1.msra.mxu0 %v596
      %598 = vmatprep.subr.mxu0 0.0
      %v599 = vand.u32 %v208, 4294901760
      %600 = vmatpush1.msra.mxu0 %v599
      %601 = vmatprep.subr.mxu0 0.0
      %v602 = vand.u32 %v209, 4294901760
      %603 = vmatpush1.msra.mxu0 %v602
      %604 = vmatprep.subr.mxu0 0.0
      %605 = vmatpush1.msra.mxu0 0.0
      %606 = vmatprep.subr.mxu0 0.0
      %607 = vmatpush1.msra.mxu0 0.0
      %608 = vmatprep.subr.mxu0 0.0
      %609 = vmatpush1.msra.mxu0 0.0
      %610 = vmatprep.subr.mxu0 0.0
      %611 = vmatpush1.msra.mxu0 0.0
      %612 = vmatprep.subr.mxu0 0.0
      %613 = vmatpush1.msra.mxu0 0.0
      %614 = vmatprep.subr.mxu0 0.0
      %615 = vmatpush1.msra.mxu0 0.0
      %616 = vmatprep.subr.mxu0 0.0
      %617 = vmatpush1.msra.mxu0 0.0
      %618 = vmatprep.subr.mxu0 0.0
      %619 = vmatpush1.msra.mxu0 0.0
      %620 = vmatprep.subr.mxu0 0.0
      %621 = vmatpush1.msra.mxu0 0.0
      %622 = vmatprep.subr.mxu0 0.0
      %623 = vmatpush1.msra.mxu0 0.0
      %624 = vmatprep.subr.mxu0 0.0
      %625 = vmatpush1.msra.mxu0 0.0
      %626 = vmatprep.subr.mxu0 0.0
      %627 = vmatpush1.msra.mxu0 0.0
      %628 = vmatprep.subr.mxu0 0.0
      %629 = vmatpush1.msra.mxu0 0.0
      %630 = vmatprep.subr.mxu0 0.0
      %631 = vmatpush1.msra.mxu0 0.0
      %632 = vmatprep.subr.mxu0 0.0
      %633 = vmatpush1.msra.mxu0 0.0
      %634 = vmatprep.subr.mxu0 0.0
      %635 = vmatpush1.msra.mxu0 0.0
      %636 = vmatprep.mubr.f32.mxu0 0.0
      %v637 = vand.u32 %v193, 4294901760
      %v638 = vsub.f32 %v193, %v637
      %v639 = vand.u32 %v638, 4294901760
      %640 = vmatmul.mubr.f32.gmra.mrb[0].mxu0 %v639
      %v641 = vpop.f32.mrb[0].mxu0
      %v642 = vadd.f32 %v553, %v641
      %v643 = vpop.f32.mrb[0].mxu0
      %644 = vdwg.mxu0
      %645 = vmatprep.subr.mxu0 0.0
      %v646 = vand.u32 %v194, 4294901760
      %v647 = vsub.f32 %v194, %v646
      %v648 = vand.u32 %v647, 4294901760
      %649 = vmatpush1.msra.mxu0 %v648
      %650 = vmatprep.subr.mxu0 0.0
      %v651 = vand.u32 %v195, 4294901760
      %v652 = vsub.f32 %v195, %v651
      %v653 = vand.u32 %v652, 4294901760
      %654 = vmatpush1.msra.mxu0 %v653
      %655 = vmatprep.subr.mxu0 0.0
      %v656 = vand.u32 %v196, 4294901760
      %v657 = vsub.f32 %v196, %v656
      %v658 = vand.u32 %v657, 4294901760
      %659 = vmatpush1.msra.mxu0 %v658
      %660 = vmatprep.subr.mxu0 0.0
      %v661 = vand.u32 %v197, 4294901760
      %v662 = vsub.f32 %v197, %v661
      %v663 = vand.u32 %v662, 4294901760
      %664 = vmatpush1.msra.mxu0 %v663
      %665 = vmatprep.subr.mxu0 0.0
      %v666 = vand.u32 %v198, 4294901760
      %v667 = vsub.f32 %v198, %v666
      %v668 = vand.u32 %v667, 4294901760
      %669 = vmatpush1.msra.mxu0 %v668
      %670 = vmatprep.subr.mxu0 0.0
      %v671 = vand.u32 %v199, 4294901760
      %v672 = vsub.f32 %v199, %v671
      %v673 = vand.u32 %v672, 4294901760
      %674 = vmatpush1.msra.mxu0 %v673
      %675 = vmatprep.subr.mxu0 0.0
      %v676 = vand.u32 %v200, 4294901760
      %v677 = vsub.f32 %v200, %v676
      %v678 = vand.u32 %v677, 4294901760
      %679 = vmatpush1.msra.mxu0 %v678
      %680 = vmatprep.subr.mxu0 0.0
      %v681 = vand.u32 %v201, 4294901760
      %v682 = vsub.f32 %v201, %v681
      %v683 = vand.u32 %v682, 4294901760
      %684 = vmatpush1.msra.mxu0 %v683
      %685 = vmatprep.subr.mxu0 0.0
      %v686 = vand.u32 %v202, 4294901760
      %v687 = vsub.f32 %v202, %v686
      %v688 = vand.u32 %v687, 4294901760
      %689 = vmatpush1.msra.mxu0 %v688
      %690 = vmatprep.subr.mxu0 0.0
      %v691 = vand.u32 %v203, 4294901760
      %v692 = vsub.f32 %v203, %v691
      %v693 = vand.u32 %v692, 4294901760
      %694 = vmatpush1.msra.mxu0 %v693
      %695 = vmatprep.subr.mxu0 0.0
      %v696 = vand.u32 %v204, 4294901760
      %v697 = vsub.f32 %v204, %v696
      %v698 = vand.u32 %v697, 4294901760
      %699 = vmatpush1.msra.mxu0 %v698
      %700 = vmatprep.subr.mxu0 0.0
      %v701 = vand.u32 %v205, 4294901760
      %v702 = vsub.f32 %v205, %v701
      %v703 = vand.u32 %v702, 4294901760
      %704 = vmatpush1.msra.mxu0 %v703
      %705 = vmatprep.subr.mxu0 0.0
      %v706 = vand.u32 %v206, 4294901760
      %v707 = vsub.f32 %v206, %v706
      %v708 = vand.u32 %v707, 4294901760
      %709 = vmatpush1.msra.mxu0 %v708
      %710 = vmatprep.subr.mxu0 0.0
      %v711 = vand.u32 %v207, 4294901760
      %v712 = vsub.f32 %v207, %v711
      %v713 = vand.u32 %v712, 4294901760
      %714 = vmatpush1.msra.mxu0 %v713
      %715 = vmatprep.subr.mxu0 0.0
      %v716 = vand.u32 %v208, 4294901760
      %v717 = vsub.f32 %v208, %v716
      %v718 = vand.u32 %v717, 4294901760
      %719 = vmatpush1.msra.mxu0 %v718
      %720 = vmatprep.subr.mxu0 0.0
      %v721 = vand.u32 %v209, 4294901760
      %v722 = vsub.f32 %v209, %v721
      %v723 = vand.u32 %v722, 4294901760
      %724 = vmatpush1.msra.mxu0 %v723
      %725 = vmatprep.subr.mxu0 0.0
      %726 = vmatpush1.msra.mxu0 0.0
      %727 = vmatprep.subr.mxu0 0.0
      %728 = vmatpush1.msra.mxu0 0.0
      %729 = vmatprep.subr.mxu0 0.0
      %730 = vmatpush1.msra.mxu0 0.0
      %731 = vmatprep.subr.mxu0 0.0
      %732 = vmatpush1.msra.mxu0 0.0
      %733 = vmatprep.subr.mxu0 0.0
      %734 = vmatpush1.msra.mxu0 0.0
      %735 = vmatprep.subr.mxu0 0.0
      %736 = vmatpush1.msra.mxu0 0.0
      %737 = vmatprep.subr.mxu0 0.0
      %738 = vmatpush1.msra.mxu0 0.0
      %739 = vmatprep.subr.mxu0 0.0
      %740 = vmatpush1.msra.mxu0 0.0
      %741 = vmatprep.subr.mxu0 0.0
      %742 = vmatpush1.msra.mxu0 0.0
      %743 = vmatprep.subr.mxu0 0.0
      %744 = vmatpush1.msra.mxu0 0.0
      %745 = vmatprep.subr.mxu0 0.0
      %746 = vmatpush1.msra.mxu0 0.0
      %747 = vmatprep.subr.mxu0 0.0
      %748 = vmatpush1.msra.mxu0 0.0
      %749 = vmatprep.subr.mxu0 0.0
      %750 = vmatpush1.msra.mxu0 0.0
      %751 = vmatprep.subr.mxu0 0.0
      %752 = vmatpush1.msra.mxu0 0.0
      %753 = vmatprep.subr.mxu0 0.0
      %754 = vmatpush1.msra.mxu0 0.0
      %755 = vmatprep.subr.mxu0 0.0
      %756 = vmatpush1.msra.mxu0 0.0
      %757 = vmatprep.mubr.f32.mxu0 0.0
      %v758 = vand.u32 %v193, 4294901760
      %759 = vmatmul.mubr.f32.gmra.mrb[0].mxu0 %v758
      %v760 = vpop.f32.mrb[0].mxu0
      %v761 = vadd.f32 %v642, %v760
      %v762 = vpop.f32.mrb[0].mxu0
      %763 = vdwg.mxu0
      %764 = vmatprep.subr.mxu0 0.0
      %v765 = vand.u32 %v194, 4294901760
      %766 = vmatpush1.msra.mxu0 %v765
      %767 = vmatprep.subr.mxu0 0.0
      %v768 = vand.u32 %v195, 4294901760
      %769 = vmatpush1.msra.mxu0 %v768
      %770 = vmatprep.subr.mxu0 0.0
      %v771 = vand.u32 %v196, 4294901760
      %772 = vmatpush1.msra.mxu0 %v771
      %773 = vmatprep.subr.mxu0 0.0
      %v774 = vand.u32 %v197, 4294901760
      %775 = vmatpush1.msra.mxu0 %v774
      %776 = vmatprep.subr.mxu0 0.0
      %v777 = vand.u32 %v198, 4294901760
      %778 = vmatpush1.msra.mxu0 %v777
      %779 = vmatprep.subr.mxu0 0.0
      %v780 = vand.u32 %v199, 4294901760
      %781 = vmatpush1.msra.mxu0 %v780
      %782 = vmatprep.subr.mxu0 0.0
      %v783 = vand.u32 %v200, 4294901760
      %784 = vmatpush1.msra.mxu0 %v783
      %785 = vmatprep.subr.mxu0 0.0
      %v786 = vand.u32 %v201, 4294901760
      %787 = vmatpush1.msra.mxu0 %v786
      %788 = vmatprep.subr.mxu0 0.0
      %v789 = vand.u32 %v202, 4294901760
      %790 = vmatpush1.msra.mxu0 %v789
      %791 = vmatprep.subr.mxu0 0.0
      %v792 = vand.u32 %v203, 4294901760
      %793 = vmatpush1.msra.mxu0 %v792
      %794 = vmatprep.subr.mxu0 0.0
      %v795 = vand.u32 %v204, 4294901760
      %796 = vmatpush1.msra.mxu0 %v795
      %797 = vmatprep.subr.mxu0 0.0
      %v798 = vand.u32 %v205, 4294901760
      %799 = vmatpush1.msra.mxu0 %v798
      %800 = vmatprep.subr.mxu0 0.0
      %v801 = vand.u32 %v206, 4294901760
      %802 = vmatpush1.msra.mxu0 %v801
      %803 = vmatprep.subr.mxu0 0.0
      %v804 = vand.u32 %v207, 4294901760
      %805 = vmatpush1.msra.mxu0 %v804
      %806 = vmatprep.subr.mxu0 0.0
      %v807 = vand.u32 %v208, 4294901760
      %808 = vmatpush1.msra.mxu0 %v807
      %809 = vmatprep.subr.mxu0 0.0
      %v810 = vand.u32 %v209, 4294901760
      %811 = vmatpush1.msra.mxu0 %v810
      %812 = vmatprep.subr.mxu0 0.0
      %813 = vmatpush1.msra.mxu0 0.0
      %814 = vmatprep.subr.mxu0 0.0
      %815 = vmatpush1.msra.mxu0 0.0
      %816 = vmatprep.subr.mxu0 0.0
      %817 = vmatpush1.msra.mxu0 0.0
      %818 = vmatprep.subr.mxu0 0.0
      %819 = vmatpush1.msra.mxu0 0.0
      %820 = vmatprep.subr.mxu0 0.0
      %821 = vmatpush1.msra.mxu0 0.0
      %822 = vmatprep.subr.mxu0 0.0
      %823 = vmatpush1.msra.mxu0 0.0
      %824 = vmatprep.subr.mxu0 0.0
      %825 = vmatpush1.msra.mxu0 0.0
      %826 = vmatprep.subr.mxu0 0.0
      %827 = vmatpush1.msra.mxu0 0.0
      %828 = vmatprep.subr.mxu0 0.0
      %829 = vmatpush1.msra.mxu0 0.0
      %830 = vmatprep.subr.mxu0 0.0
      %831 = vmatpush1.msra.mxu0 0.0
      %832 = vmatprep.subr.mxu0 0.0
      %833 = vmatpush1.msra.mxu0 0.0
      %834 = vmatprep.subr.mxu0 0.0
      %835 = vmatpush1.msra.mxu0 0.0
      %836 = vmatprep.subr.mxu0 0.0
      %837 = vmatpush1.msra.mxu0 0.0
      %838 = vmatprep.subr.mxu0 0.0
      %839 = vmatpush1.msra.mxu0 0.0
      %840 = vmatprep.subr.mxu0 0.0
      %841 = vmatpush1.msra.mxu0 0.0
      %842 = vmatprep.subr.mxu0 0.0
      %843 = vmatpush1.msra.mxu0 0.0
      %844 = vmatprep.mubr.f32.mxu0 0.0
      %v845 = vand.u32 %v193, 4294901760
      %846 = vmatmul.mubr.f32.gmra.mrb[0].mxu0 %v845
      %v847 = vpop.f32.mrb[0].mxu0
      %v848 = vadd.f32 %v761, %v847
      %v849 = vpop.f32.mrb[0].mxu0
      %850 = vdwg.mxu0
      %v851 = vmul.f32 %v848, 0.03125
      %v852 = vsub.f32 %v193, %v851
      %v853 = vmul.f32 %v852, %v852
      %854 = vmatprep.subr.mxu0 0.0
      %v855 = vand.u32 %v194, 4294901760
      %856 = vmatpush1.msra.mxu0 %v855
      %857 = vmatprep.subr.mxu0 0.0
      %v858 = vand.u32 %v195, 4294901760
      %859 = vmatpush1.msra.mxu0 %v858
      %860 = vmatprep.subr.mxu0 0.0
      %v861 = vand.u32 %v196, 4294901760
      %862 = vmatpush1.msra.mxu0 %v861
      %863 = vmatprep.subr.mxu0 0.0
      %v864 = vand.u32 %v197, 4294901760
      %865 = vmatpush1.msra.mxu0 %v864
      %866 = vmatprep.subr.mxu0 0.0
      %v867 = vand.u32 %v198, 4294901760
      %868 = vmatpush1.msra.mxu0 %v867
      %869 = vmatprep.subr.mxu0 0.0
      %v870 = vand.u32 %v199, 4294901760
      %871 = vmatpush1.msra.mxu0 %v870
      %872 = vmatprep.subr.mxu0 0.0
      %v873 = vand.u32 %v200, 4294901760
      %874 = vmatpush1.msra.mxu0 %v873
      %875 = vmatprep.subr.mxu0 0.0
      %v876 = vand.u32 %v201, 4294901760
      %877 = vmatpush1.msra.mxu0 %v876
      %878 = vmatprep.subr.mxu0 0.0
      %v879 = vand.u32 %v202, 4294901760
      %880 = vmatpush1.msra.mxu0 %v879
      %881 = vmatprep.subr.mxu0 0.0
      %v882 = vand.u32 %v203, 4294901760
      %883 = vmatpush1.msra.mxu0 %v882
      %884 = vmatprep.subr.mxu0 0.0
      %v885 = vand.u32 %v204, 4294901760
      %886 = vmatpush1.msra.mxu0 %v885
      %887 = vmatprep.subr.mxu0 0.0
      %v888 = vand.u32 %v205, 4294901760
      %889 = vmatpush1.msra.mxu0 %v888
      %890 = vmatprep.subr.mxu0 0.0
      %v891 = vand.u32 %v206, 4294901760
      %892 = vmatpush1.msra.mxu0 %v891
      %893 = vmatprep.subr.mxu0 0.0
      %v894 = vand.u32 %v207, 4294901760
      %895 = vmatpush1.msra.mxu0 %v894
      %896 = vmatprep.subr.mxu0 0.0
      %v897 = vand.u32 %v208, 4294901760
      %898 = vmatpush1.msra.mxu0 %v897
      %899 = vmatprep.subr.mxu0 0.0
      %v900 = vand.u32 %v209, 4294901760
      %901 = vmatpush1.msra.mxu0 %v900
      %902 = vmatprep.subr.mxu0 0.0
      %903 = vmatpush1.msra.mxu0 0.0
      %904 = vmatprep.subr.mxu0 0.0
      %905 = vmatpush1.msra.mxu0 0.0
      %906 = vmatprep.subr.mxu0 0.0
      %907 = vmatpush1.msra.mxu0 0.0
      %908 = vmatprep.subr.mxu0 0.0
      %909 = vmatpush1.msra.mxu0 0.0
      %910 = vmatprep.subr.mxu0 0.0
      %911 = vmatpush1.msra.mxu0 0.0
      %912 = vmatprep.subr.mxu0 0.0
      %913 = vmatpush1.msra.mxu0 0.0
      %914 = vmatprep.subr.mxu0 0.0
      %915 = vmatpush1.msra.mxu0 0.0
      %916 = vmatprep.subr.mxu0 0.0
      %917 = vmatpush1.msra.mxu0 0.0
      %918 = vmatprep.subr.mxu0 0.0
      %919 = vmatpush1.msra.mxu0 0.0
      %920 = vmatprep.subr.mxu0 0.0
      %921 = vmatpush1.msra.mxu0 0.0
      %922 = vmatprep.subr.mxu0 0.0
      %923 = vmatpush1.msra.mxu0 0.0
      %924 = vmatprep.subr.mxu0 0.0
      %925 = vmatpush1.msra.mxu0 0.0
      %926 = vmatprep.subr.mxu0 0.0
      %927 = vmatpush1.msra.mxu0 0.0
      %928 = vmatprep.subr.mxu0 0.0
      %929 = vmatpush1.msra.mxu0 0.0
      %930 = vmatprep.subr.mxu0 0.0
      %931 = vmatpush1.msra.mxu0 0.0
      %932 = vmatprep.subr.mxu0 0.0
      %933 = vmatpush1.msra.mxu0 0.0
      %934 = vmatprep.mubr.f32.mxu0 0.0
      %v935 = vand.u32 %v853, 4294901760
      %v936 = vsub.f32 %v853, %v935
      %v937 = vand.u32 %v936, 4294901760
      %v938 = vsub.f32 %v936, %v937
      %v939 = vand.u32 %v938, 4294901760
      %940 = vmatmul.mubr.f32.gmra.mrb[0].mxu0 %v939
      %v941 = vpop.f32.mrb[0].mxu0
      %v942 = vadd.f32 0.0, %v941
      %v943 = vpop.f32.mrb[0].mxu0
      %944 = vdwg.mxu0
      %945 = vmatprep.subr.mxu0 0.0
      %v946 = vand.u32 %v194, 4294901760
      %v947 = vsub.f32 %v194, %v946
      %v948 = vand.u32 %v947, 4294901760
      %v949 = vsub.f32 %v947, %v948
      %v950 = vand.u32 %v949, 4294901760
      %951 = vmatpush1.msra.mxu0 %v950
      %952 = vmatprep.subr.mxu0 0.0
      %v953 = vand.u32 %v195, 4294901760
      %v954 = vsub.f32 %v195, %v953
      %v955 = vand.u32 %v954, 4294901760
      %v956 = vsub.f32 %v954, %v955
      %v957 = vand.u32 %v956, 4294901760
      %958 = vmatpush1.msra.mxu0 %v957
      %959 = vmatprep.subr.mxu0 0.0
      %v960 = vand.u32 %v196, 4294901760
      %v961 = vsub.f32 %v196, %v960
      %v962 = vand.u32 %v961, 4294901760
      %v963 = vsub.f32 %v961, %v962
      %v964 = vand.u32 %v963, 4294901760
      %965 = vmatpush1.msra.mxu0 %v964
      %966 = vmatprep.subr.mxu0 0.0
      %v967 = vand.u32 %v197, 4294901760
      %v968 = vsub.f32 %v197, %v967
      %v969 = vand.u32 %v968, 4294901760
      %v970 = vsub.f32 %v968, %v969
      %v971 = vand.u32 %v970, 4294901760
      %972 = vmatpush1.msra.mxu0 %v971
      %973 = vmatprep.subr.mxu0 0.0
      %v974 = vand.u32 %v198, 4294901760
      %v975 = vsub.f32 %v198, %v974
      %v976 = vand.u32 %v975, 4294901760
      %v977 = vsub.f32 %v975, %v976
      %v978 = vand.u32 %v977, 4294901760
      %979 = vmatpush1.msra.mxu0 %v978
      %980 = vmatprep.subr.mxu0 0.0
      %v981 = vand.u32 %v199, 4294901760
      %v982 = vsub.f32 %v199, %v981
      %v983 = vand.u32 %v982, 4294901760
      %v984 = vsub.f32 %v982, %v983
      %v985 = vand.u32 %v984, 4294901760
      %986 = vmatpush1.msra.mxu0 %v985
      %987 = vmatprep.subr.mxu0 0.0
      %v988 = vand.u32 %v200, 4294901760
      %v989 = vsub.f32 %v200, %v988
      %v990 = vand.u32 %v989, 4294901760
      %v991 = vsub.f32 %v989, %v990
      %v992 = vand.u32 %v991, 4294901760
      %993 = vmatpush1.msra.mxu0 %v992
      %994 = vmatprep.subr.mxu0 0.0
      %v995 = vand.u32 %v201, 4294901760
      %v996 = vsub.f32 %v201, %v995
      %v997 = vand.u32 %v996, 4294901760
      %v998 = vsub.f32 %v996, %v997
      %v999 = vand.u32 %v998, 4294901760
      %1000 = vmatpush1.msra.mxu0 %v999
      %1001 = vmatprep.subr.mxu0 0.0
      %v1002 = vand.u32 %v202, 4294901760
      %v1003 = vsub.f32 %v202, %v1002
      %v1004 = vand.u32 %v1003, 4294901760
      %v1005 = vsub.f32 %v1003, %v1004
      %v1006 = vand.u32 %v1005, 4294901760
      %1007 = vmatpush1.msra.mxu0 %v1006
      %1008 = vmatprep.subr.mxu0 0.0
      %v1009 = vand.u32 %v203, 4294901760
      %v1010 = vsub.f32 %v203, %v1009
      %v1011 = vand.u32 %v1010, 4294901760
      %v1012 = vsub.f32 %v1010, %v1011
      %v1013 = vand.u32 %v1012, 4294901760
      %1014 = vmatpush1.msra.mxu0 %v1013
      %1015 = vmatprep.subr.mxu0 0.0
      %v1016 = vand.u32 %v204, 4294901760
      %v1017 = vsub.f32 %v204, %v1016
      %v1018 = vand.u32 %v1017, 4294901760
      %v1019 = vsub.f32 %v1017, %v1018
      %v1020 = vand.u32 %v1019, 4294901760
      %1021 = vmatpush1.msra.mxu0 %v1020
      %1022 = vmatprep.subr.mxu0 0.0
      %v1023 = vand.u32 %v205, 4294901760
      %v1024 = vsub.f32 %v205, %v1023
      %v1025 = vand.u32 %v1024, 4294901760
      %v1026 = vsub.f32 %v1024, %v1025
      %v1027 = vand.u32 %v1026, 4294901760
      %1028 = vmatpush1.msra.mxu0 %v1027
      %1029 = vmatprep.subr.mxu0 0.0
      %v1030 = vand.u32 %v206, 4294901760
      %v1031 = vsub.f32 %v206, %v1030
      %v1032 = vand.u32 %v1031, 4294901760
      %v1033 = vsub.f32 %v1031, %v1032
      %v1034 = vand.u32 %v1033, 4294901760
      %1035 = vmatpush1.msra.mxu0 %v1034
      %1036 = vmatprep.subr.mxu0 0.0
      %v1037 = vand.u32 %v207, 4294901760
      %v1038 = vsub.f32 %v207, %v1037
      %v1039 = vand.u32 %v1038, 4294901760
      %v1040 = vsub.f32 %v1038, %v1039
      %v1041 = vand.u32 %v1040, 4294901760
      %1042 = vmatpush1.msra.mxu0 %v1041
      %1043 = vmatprep.subr.mxu0 0.0
      %v1044 = vand.u32 %v208, 4294901760
      %v1045 = vsub.f32 %v208, %v1044
      %v1046 = vand.u32 %v1045, 4294901760
      %v1047 = vsub.f32 %v1045, %v1046
      %v1048 = vand.u32 %v1047, 4294901760
      %1049 = vmatpush1.msra.mxu0 %v1048
      %1050 = vmatprep.subr.mxu0 0.0
      %v1051 = vand.u32 %v209, 4294901760
      %v1052 = vsub.f32 %v209, %v1051
      %v1053 = vand.u32 %v1052, 4294901760
      %v1054 = vsub.f32 %v1052, %v1053
      %v1055 = vand.u32 %v1054, 4294901760
      %1056 = vmatpush1.msra.mxu0 %v1055
      %1057 = vmatprep.subr.mxu0 0.0
      %1058 = vmatpush1.msra.mxu0 0.0
      %1059 = vmatprep.subr.mxu0 0.0
      %1060 = vmatpush1.msra.mxu0 0.0
      %1061 = vmatprep.subr.mxu0 0.0
      %1062 = vmatpush1.msra.mxu0 0.0
      %1063 = vmatprep.subr.mxu0 0.0
      %1064 = vmatpush1.msra.mxu0 0.0
      %1065 = vmatprep.subr.mxu0 0.0
      %1066 = vmatpush1.msra.mxu0 0.0
      %1067 = vmatprep.subr.mxu0 0.0
      %1068 = vmatpush1.msra.mxu0 0.0
      %1069 = vmatprep.subr.mxu0 0.0
      %1070 = vmatpush1.msra.mxu0 0.0
      %1071 = vmatprep.subr.mxu0 0.0
      %1072 = vmatpush1.msra.mxu0 0.0
      %1073 = vmatprep.subr.mxu0 0.0
      %1074 = vmatpush1.msra.mxu0 0.0
      %1075 = vmatprep.subr.mxu0 0.0
      %1076 = vmatpush1.msra.mxu0 0.0
      %1077 = vmatprep.subr.mxu0 0.0
      %1078 = vmatpush1.msra.mxu0 0.0
      %1079 = vmatprep.subr.mxu0 0.0
      %1080 = vmatpush1.msra.mxu0 0.0
      %1081 = vmatprep.subr.mxu0 0.0
      %1082 = vmatpush1.msra.mxu0 0.0
      %1083 = vmatprep.subr.mxu0 0.0
      %1084 = vmatpush1.msra.mxu0 0.0
      %1085 = vmatprep.subr.mxu0 0.0
      %1086 = vmatpush1.msra.mxu0 0.0
      %1087 = vmatprep.subr.mxu0 0.0
      %1088 = vmatpush1.msra.mxu0 0.0
      %1089 = vmatprep.mubr.f32.mxu0 0.0
      %v1090 = vand.u32 %v853, 4294901760
      %1091 = vmatmul.mubr.f32.gmra.mrb[0].mxu0 %v1090
      %v1092 = vpop.f32.mrb[0].mxu0
      %v1093 = vadd.f32 %v942, %v1092
      %v1094 = vpop.f32.mrb[0].mxu0
      %1095 = vdwg.mxu0
      %1096 = vmatprep.subr.mxu0 0.0
      %v1097 = vand.u32 %v194, 4294901760
      %v1098 = vsub.f32 %v194, %v1097
      %1099 = vmatpush1.msra.mxu0 %v1098
      %1100 = vmatprep.subr.mxu0 0.0
      %v1101 = vand.u32 %v195, 4294901760
      %v1102 = vsub.f32 %v195, %v1101
      %1103 = vmatpush1.msra.mxu0 %v1102
      %1104 = vmatprep.subr.mxu0 0.0
      %v1105 = vand.u32 %v196, 4294901760
      %v1106 = vsub.f32 %v196, %v1105
      %1107 = vmatpush1.msra.mxu0 %v1106
      %1108 = vmatprep.subr.mxu0 0.0
      %v1109 = vand.u32 %v197, 4294901760
      %v1110 = vsub.f32 %v197, %v1109
      %1111 = vmatpush1.msra.mxu0 %v1110
      %1112 = vmatprep.subr.mxu0 0.0
      %v1113 = vand.u32 %v198, 4294901760
      %v1114 = vsub.f32 %v198, %v1113
      %1115 = vmatpush1.msra.mxu0 %v1114
      %1116 = vmatprep.subr.mxu0 0.0
      %v1117 = vand.u32 %v199, 4294901760
      %v1118 = vsub.f32 %v199, %v1117
      %1119 = vmatpush1.msra.mxu0 %v1118
      %1120 = vmatprep.subr.mxu0 0.0
      %v1121 = vand.u32 %v200, 4294901760
      %v1122 = vsub.f32 %v200, %v1121
      %1123 = vmatpush1.msra.mxu0 %v1122
      %1124 = vmatprep.subr.mxu0 0.0
      %v1125 = vand.u32 %v201, 4294901760
      %v1126 = vsub.f32 %v201, %v1125
      %1127 = vmatpush1.msra.mxu0 %v1126
      %1128 = vmatprep.subr.mxu0 0.0
      %v1129 = vand.u32 %v202, 4294901760
      %v1130 = vsub.f32 %v202, %v1129
      %1131 = vmatpush1.msra.mxu0 %v1130
      %1132 = vmatprep.subr.mxu0 0.0
      %v1133 = vand.u32 %v203, 4294901760
      %v1134 = vsub.f32 %v203, %v1133
      %1135 = vmatpush1.msra.mxu0 %v1134
      %1136 = vmatprep.subr.mxu0 0.0
      %v1137 = vand.u32 %v204, 4294901760
      %v1138 = vsub.f32 %v204, %v1137
      %1139 = vmatpush1.msra.mxu0 %v1138
      %1140 = vmatprep.subr.mxu0 0.0
      %v1141 = vand.u32 %v205, 4294901760
      %v1142 = vsub.f32 %v205, %v1141
      %1143 = vmatpush1.msra.mxu0 %v1142
      %1144 = vmatprep.subr.mxu0 0.0
      %v1145 = vand.u32 %v206, 4294901760
      %v1146 = vsub.f32 %v206, %v1145
      %1147 = vmatpush1.msra.mxu0 %v1146
      %1148 = vmatprep.subr.mxu0 0.0
      %v1149 = vand.u32 %v207, 4294901760
      %v1150 = vsub.f32 %v207, %v1149
      %1151 = vmatpush1.msra.mxu0 %v1150
      %1152 = vmatprep.subr.mxu0 0.0
      %v1153 = vand.u32 %v208, 4294901760
      %v1154 = vsub.f32 %v208, %v1153
      %1155 = vmatpush1.msra.mxu0 %v1154
      %1156 = vmatprep.subr.mxu0 0.0
      %v1157 = vand.u32 %v209, 4294901760
      %v1158 = vsub.f32 %v209, %v1157
      %1159 = vmatpush1.msra.mxu0 %v1158
      %1160 = vmatprep.subr.mxu0 0.0
      %1161 = vmatpush1.msra.mxu0 0.0
      %1162 = vmatprep.subr.mxu0 0.0
      %1163 = vmatpush1.msra.mxu0 0.0
      %1164 = vmatprep.subr.mxu0 0.0
      %1165 = vmatpush1.msra.mxu0 0.0
      %1166 = vmatprep.subr.mxu0 0.0
      %1167 = vmatpush1.msra.mxu0 0.0
      %1168 = vmatprep.subr.mxu0 0.0
      %1169 = vmatpush1.msra.mxu0 0.0
      %1170 = vmatprep.subr.mxu0 0.0
      %1171 = vmatpush1.msra.mxu0 0.0
      %1172 = vmatprep.subr.mxu0 0.0
      %1173 = vmatpush1.msra.mxu0 0.0
      %1174 = vmatprep.subr.mxu0 0.0
      %1175 = vmatpush1.msra.mxu0 0.0
      %1176 = vmatprep.subr.mxu0 0.0
      %1177 = vmatpush1.msra.mxu0 0.0
      %1178 = vmatprep.subr.mxu0 0.0
      %1179 = vmatpush1.msra.mxu0 0.0
      %1180 = vmatprep.subr.mxu0 0.0
      %1181 = vmatpush1.msra.mxu0 0.0
      %1182 = vmatprep.subr.mxu0 0.0
      %1183 = vmatpush1.msra.mxu0 0.0
      %1184 = vmatprep.subr.mxu0 0.0
      %1185 = vmatpush1.msra.mxu0 0.0
      %1186 = vmatprep.subr.mxu0 0.0
      %1187 = vmatpush1.msra.mxu0 0.0
      %1188 = vmatprep.subr.mxu0 0.0
      %1189 = vmatpush1.msra.mxu0 0.0
      %1190 = vmatprep.subr.mxu0 0.0
      %1191 = vmatpush1.msra.mxu0 0.0
      %1192 = vmatprep.mubr.f32.mxu0 0.0
      %v1193 = vand.u32 %v853, 4294901760
      %v1194 = vsub.f32 %v853, %v1193
      %1195 = vmatmul.mubr.f32.gmra.mrb[0].mxu0 %v1194
      %v1196 = vpop.f32.mrb[0].mxu0
      %v1197 = vadd.f32 %v1093, %v1196
      %v1198 = vpop.f32.mrb[0].mxu0
      %1199 = vdwg.mxu0
      %1200 = vmatprep.subr.mxu0 0.0
      %v1201 = vand.u32 %v194, 4294901760
      %1202 = vmatpush1.msra.mxu0 %v1201
      %1203 = vmatprep.subr.mxu0 0.0
      %v1204 = vand.u32 %v195, 4294901760
      %1205 = vmatpush1.msra.mxu0 %v1204
      %1206 = vmatprep.subr.mxu0 0.0
      %v1207 = vand.u32 %v196, 4294901760
      %1208 = vmatpush1.msra.mxu0 %v1207
      %1209 = vmatprep.subr.mxu0 0.0
      %v1210 = vand.u32 %v197, 4294901760
      %1211 = vmatpush1.msra.mxu0 %v1210
      %1212 = vmatprep.subr.mxu0 0.0
      %v1213 = vand.u32 %v198, 4294901760
      %1214 = vmatpush1.msra.mxu0 %v1213
      %1215 = vmatprep.subr.mxu0 0.0
      %v1216 = vand.u32 %v199, 4294901760
      %1217 = vmatpush1.msra.mxu0 %v1216
      %1218 = vmatprep.subr.mxu0 0.0
      %v1219 = vand.u32 %v200, 4294901760
      %1220 = vmatpush1.msra.mxu0 %v1219
      %1221 = vmatprep.subr.mxu0 0.0
      %v1222 = vand.u32 %v201, 4294901760
      %1223 = vmatpush1.msra.mxu0 %v1222
      %1224 = vmatprep.subr.mxu0 0.0
      %v1225 = vand.u32 %v202, 4294901760
      %1226 = vmatpush1.msra.mxu0 %v1225
      %1227 = vmatprep.subr.mxu0 0.0
      %v1228 = vand.u32 %v203, 4294901760
      %1229 = vmatpush1.msra.mxu0 %v1228
      %1230 = vmatprep.subr.mxu0 0.0
      %v1231 = vand.u32 %v204, 4294901760
      %1232 = vmatpush1.msra.mxu0 %v1231
      %1233 = vmatprep.subr.mxu0 0.0
      %v1234 = vand.u32 %v205, 4294901760
      %1235 = vmatpush1.msra.mxu0 %v1234
      %1236 = vmatprep.subr.mxu0 0.0
      %v1237 = vand.u32 %v206, 4294901760
      %1238 = vmatpush1.msra.mxu0 %v1237
      %1239 = vmatprep.subr.mxu0 0.0
      %v1240 = vand.u32 %v207, 4294901760
      %1241 = vmatpush1.msra.mxu0 %v1240
      %1242 = vmatprep.subr.mxu0 0.0
      %v1243 = vand.u32 %v208, 4294901760
      %1244 = vmatpush1.msra.mxu0 %v1243
      %1245 = vmatprep.subr.mxu0 0.0
      %v1246 = vand.u32 %v209, 4294901760
      %1247 = vmatpush1.msra.mxu0 %v1246
      %1248 = vmatprep.subr.mxu0 0.0
      %1249 = vmatpush1.msra.mxu0 0.0
      %1250 = vmatprep.subr.mxu0 0.0
      %1251 = vmatpush1.msra.mxu0 0.0
      %1252 = vmatprep.subr.mxu0 0.0
      %1253 = vmatpush1.msra.mxu0 0.0
      %1254 = vmatprep.subr.mxu0 0.0
      %1255 = vmatpush1.msra.mxu0 0.0
      %1256 = vmatprep.subr.mxu0 0.0
      %1257 = vmatpush1.msra.mxu0 0.0
      %1258 = vmatprep.subr.mxu0 0.0
      %1259 = vmatpush1.msra.mxu0 0.0
      %1260 = vmatprep.subr.mxu0 0.0
      %1261 = vmatpush1.msra.mxu0 0.0
      %1262 = vmatprep.subr.mxu0 0.0
      %1263 = vmatpush1.msra.mxu0 0.0
      %1264 = vmatprep.subr.mxu0 0.0
      %1265 = vmatpush1.msra.mxu0 0.0
      %1266 = vmatprep.subr.mxu0 0.0
      %1267 = vmatpush1.msra.mxu0 0.0
      %1268 = vmatprep.subr.mxu0 0.0
      %1269 = vmatpush1.msra.mxu0 0.0
      %1270 = vmatprep.subr.mxu0 0.0
      %1271 = vmatpush1.msra.mxu0 0.0
      %1272 = vmatprep.subr.mxu0 0.0
      %1273 = vmatpush1.msra.mxu0 0.0
      %1274 = vmatprep.subr.mxu0 0.0
      %1275 = vmatpush1.msra.mxu0 0.0
      %1276 = vmatprep.subr.mxu0 0.0
      %1277 = vmatpush1.msra.mxu0 0.0
      %1278 = vmatprep.subr.mxu0 0.0
      %1279 = vmatpush1.msra.mxu0 0.0
      %1280 = vmatprep.mubr.f32.mxu0 0.0
      %v1281 = vand.u32 %v853, 4294901760
      %v1282 = vsub.f32 %v853, %v1281
      %v1283 = vand.u32 %v1282, 4294901760
      %1284 = vmatmul.mubr.f32.gmra.mrb[0].mxu0 %v1283
      %v1285 = vpop.f32.mrb[0].mxu0
      %v1286 = vadd.f32 %v1197, %v1285
      %v1287 = vpop.f32.mrb[0].mxu0
      %1288 = vdwg.mxu0
      %1289 = vmatprep.subr.mxu0 0.0
      %v1290 = vand.u32 %v194, 4294901760
      %v1291 = vsub.f32 %v194, %v1290
      %v1292 = vand.u32 %v1291, 4294901760
      %1293 = vmatpush1.msra.mxu0 %v1292
      %1294 = vmatprep.subr.mxu0 0.0
      %v1295 = vand.u32 %v195, 4294901760
      %v1296 = vsub.f32 %v195, %v1295
      %v1297 = vand.u32 %v1296, 4294901760
      %1298 = vmatpush1.msra.mxu0 %v1297
      %1299 = vmatprep.subr.mxu0 0.0
      %v1300 = vand.u32 %v196, 4294901760
      %v1301 = vsub.f32 %v196, %v1300
      %v1302 = vand.u32 %v1301, 4294901760
      %1303 = vmatpush1.msra.mxu0 %v1302
      %1304 = vmatprep.subr.mxu0 0.0
      %v1305 = vand.u32 %v197, 4294901760
      %v1306 = vsub.f32 %v197, %v1305
      %v1307 = vand.u32 %v1306, 4294901760
      %1308 = vmatpush1.msra.mxu0 %v1307
      %1309 = vmatprep.subr.mxu0 0.0
      %v1310 = vand.u32 %v198, 4294901760
      %v1311 = vsub.f32 %v198, %v1310
      %v1312 = vand.u32 %v1311, 4294901760
      %1313 = vmatpush1.msra.mxu0 %v1312
      %1314 = vmatprep.subr.mxu0 0.0
      %v1315 = vand.u32 %v199, 4294901760
      %v1316 = vsub.f32 %v199, %v1315
      %v1317 = vand.u32 %v1316, 4294901760
      %1318 = vmatpush1.msra.mxu0 %v1317
      %1319 = vmatprep.subr.mxu0 0.0
      %v1320 = vand.u32 %v200, 4294901760
      %v1321 = vsub.f32 %v200, %v1320
      %v1322 = vand.u32 %v1321, 4294901760
      %1323 = vmatpush1.msra.mxu0 %v1322
      %1324 = vmatprep.subr.mxu0 0.0
      %v1325 = vand.u32 %v201, 4294901760
      %v1326 = vsub.f32 %v201, %v1325
      %v1327 = vand.u32 %v1326, 4294901760
      %1328 = vmatpush1.msra.mxu0 %v1327
      %1329 = vmatprep.subr.mxu0 0.0
      %v1330 = vand.u32 %v202, 4294901760
      %v1331 = vsub.f32 %v202, %v1330
      %v1332 = vand.u32 %v1331, 4294901760
      %1333 = vmatpush1.msra.mxu0 %v1332
      %1334 = vmatprep.subr.mxu0 0.0
      %v1335 = vand.u32 %v203, 4294901760
      %v1336 = vsub.f32 %v203, %v1335
      %v1337 = vand.u32 %v1336, 4294901760
      %1338 = vmatpush1.msra.mxu0 %v1337
      %1339 = vmatprep.subr.mxu0 0.0
      %v1340 = vand.u32 %v204, 4294901760
      %v1341 = vsub.f32 %v204, %v1340
      %v1342 = vand.u32 %v1341, 4294901760
      %1343 = vmatpush1.msra.mxu0 %v1342
      %1344 = vmatprep.subr.mxu0 0.0
      %v1345 = vand.u32 %v205, 4294901760
      %v1346 = vsub.f32 %v205, %v1345
      %v1347 = vand.u32 %v1346, 4294901760
      %1348 = vmatpush1.msra.mxu0 %v1347
      %1349 = vmatprep.subr.mxu0 0.0
      %v1350 = vand.u32 %v206, 4294901760
      %v1351 = vsub.f32 %v206, %v1350
      %v1352 = vand.u32 %v1351, 4294901760
      %1353 = vmatpush1.msra.mxu0 %v1352
      %1354 = vmatprep.subr.mxu0 0.0
      %v1355 = vand.u32 %v207, 4294901760
      %v1356 = vsub.f32 %v207, %v1355
      %v1357 = vand.u32 %v1356, 4294901760
      %1358 = vmatpush1.msra.mxu0 %v1357
      %1359 = vmatprep.subr.mxu0 0.0
      %v1360 = vand.u32 %v208, 4294901760
      %v1361 = vsub.f32 %v208, %v1360
      %v1362 = vand.u32 %v1361, 4294901760
      %1363 = vmatpush1.msra.mxu0 %v1362
      %1364 = vmatprep.subr.mxu0 0.0
      %v1365 = vand.u32 %v209, 4294901760
      %v1366 = vsub.f32 %v209, %v1365
      %v1367 = vand.u32 %v1366, 4294901760
      %1368 = vmatpush1.msra.mxu0 %v1367
      %1369 = vmatprep.subr.mxu0 0.0
      %1370 = vmatpush1.msra.mxu0 0.0
      %1371 = vmatprep.subr.mxu0 0.0
      %1372 = vmatpush1.msra.mxu0 0.0
      %1373 = vmatprep.subr.mxu0 0.0
      %1374 = vmatpush1.msra.mxu0 0.0
      %1375 = vmatprep.subr.mxu0 0.0
      %1376 = vmatpush1.msra.mxu0 0.0
      %1377 = vmatprep.subr.mxu0 0.0
      %1378 = vmatpush1.msra.mxu0 0.0
      %1379 = vmatprep.subr.mxu0 0.0
      %1380 = vmatpush1.msra.mxu0 0.0
      %1381 = vmatprep.subr.mxu0 0.0
      %1382 = vmatpush1.msra.mxu0 0.0
      %1383 = vmatprep.subr.mxu0 0.0
      %1384 = vmatpush1.msra.mxu0 0.0
      %1385 = vmatprep.subr.mxu0 0.0
      %1386 = vmatpush1.msra.mxu0 0.0
      %1387 = vmatprep.subr.mxu0 0.0
      %1388 = vmatpush1.msra.mxu0 0.0
      %1389 = vmatprep.subr.mxu0 0.0
      %1390 = vmatpush1.msra.mxu0 0.0
      %1391 = vmatprep.subr.mxu0 0.0
      %1392 = vmatpush1.msra.mxu0 0.0
      %1393 = vmatprep.subr.mxu0 0.0
      %1394 = vmatpush1.msra.mxu0 0.0
      %1395 = vmatprep.subr.mxu0 0.0
      %1396 = vmatpush1.msra.mxu0 0.0
      %1397 = vmatprep.subr.mxu0 0.0
      %1398 = vmatpush1.msra.mxu0 0.0
      %1399 = vmatprep.subr.mxu0 0.0
      %1400 = vmatpush1.msra.mxu0 0.0
      %1401 = vmatprep.mubr.f32.mxu0 0.0
      %v1402 = vand.u32 %v853, 4294901760
      %1403 = vmatmul.mubr.f32.gmra.mrb[0].mxu0 %v1402
      %v1404 = vpop.f32.mrb[0].mxu0
      %v1405 = vadd.f32 %v1286, %v1404
      %v1406 = vpop.f32.mrb[0].mxu0
      %1407 = vdwg.mxu0
      %1408 = vmatprep.subr.mxu0 0.0
      %v1409 = vand.u32 %v194, 4294901760
      %1410 = vmatpush1.msra.mxu0 %v1409
      %1411 = vmatprep.subr.mxu0 0.0
      %v1412 = vand.u32 %v195, 4294901760
      %1413 = vmatpush1.msra.mxu0 %v1412
      %1414 = vmatprep.subr.mxu0 0.0
      %v1415 = vand.u32 %v196, 4294901760
      %1416 = vmatpush1.msra.mxu0 %v1415
      %1417 = vmatprep.subr.mxu0 0.0
      %v1418 = vand.u32 %v197, 4294901760
      %1419 = vmatpush1.msra.mxu0 %v1418
      %1420 = vmatprep.subr.mxu0 0.0
      %v1421 = vand.u32 %v198, 4294901760
      %1422 = vmatpush1.msra.mxu0 %v1421
      %1423 = vmatprep.subr.mxu0 0.0
      %v1424 = vand.u32 %v199, 4294901760
      %1425 = vmatpush1.msra.mxu0 %v1424
      %1426 = vmatprep.subr.mxu0 0.0
      %v1427 = vand.u32 %v200, 4294901760
      %1428 = vmatpush1.msra.mxu0 %v1427
      %1429 = vmatprep.subr.mxu0 0.0
      %v1430 = vand.u32 %v201, 4294901760
      %1431 = vmatpush1.msra.mxu0 %v1430
      %1432 = vmatprep.subr.mxu0 0.0
      %v1433 = vand.u32 %v202, 4294901760
      %1434 = vmatpush1.msra.mxu0 %v1433
      %1435 = vmatprep.subr.mxu0 0.0
      %v1436 = vand.u32 %v203, 4294901760
      %1437 = vmatpush1.msra.mxu0 %v1436
      %1438 = vmatprep.subr.mxu0 0.0
      %v1439 = vand.u32 %v204, 4294901760
      %1440 = vmatpush1.msra.mxu0 %v1439
      %1441 = vmatprep.subr.mxu0 0.0
      %v1442 = vand.u32 %v205, 4294901760
      %1443 = vmatpush1.msra.mxu0 %v1442
      %1444 = vmatprep.subr.mxu0 0.0
      %v1445 = vand.u32 %v206, 4294901760
      %1446 = vmatpush1.msra.mxu0 %v1445
      %1447 = vmatprep.subr.mxu0 0.0
      %v1448 = vand.u32 %v207, 4294901760
      %1449 = vmatpush1.msra.mxu0 %v1448
      %1450 = vmatprep.subr.mxu0 0.0
      %v1451 = vand.u32 %v208, 4294901760
      %1452 = vmatpush1.msra.mxu0 %v1451
      %1453 = vmatprep.subr.mxu0 0.0
      %v1454 = vand.u32 %v209, 4294901760
      %1455 = vmatpush1.msra.mxu0 %v1454
      %1456 = vmatprep.subr.mxu0 0.0
      %1457 = vmatpush1.msra.mxu0 0.0
      %1458 = vmatprep.subr.mxu0 0.0
      %1459 = vmatpush1.msra.mxu0 0.0
      %1460 = vmatprep.subr.mxu0 0.0
      %1461 = vmatpush1.msra.mxu0 0.0
      %1462 = vmatprep.subr.mxu0 0.0
      %1463 = vmatpush1.msra.mxu0 0.0
      %1464 = vmatprep.subr.mxu0 0.0
      %1465 = vmatpush1.msra.mxu0 0.0
      %1466 = vmatprep.subr.mxu0 0.0
      %1467 = vmatpush1.msra.mxu0 0.0
      %1468 = vmatprep.subr.mxu0 0.0
      %1469 = vmatpush1.msra.mxu0 0.0
      %1470 = vmatprep.subr.mxu0 0.0
      %1471 = vmatpush1.msra.mxu0 0.0
      %1472 = vmatprep.subr.mxu0 0.0
      %1473 = vmatpush1.msra.mxu0 0.0
      %1474 = vmatprep.subr.mxu0 0.0
      %1475 = vmatpush1.msra.mxu0 0.0
      %1476 = vmatprep.subr.mxu0 0.0
      %1477 = vmatpush1.msra.mxu0 0.0
      %1478 = vmatprep.subr.mxu0 0.0
      %1479 = vmatpush1.msra.mxu0 0.0
      %1480 = vmatprep.subr.mxu0 0.0
      %1481 = vmatpush1.msra.mxu0 0.0
      %1482 = vmatprep.subr.mxu0 0.0
      %1483 = vmatpush1.msra.mxu0 0.0
      %1484 = vmatprep.subr.mxu0 0.0
      %1485 = vmatpush1.msra.mxu0 0.0
      %1486 = vmatprep.subr.mxu0 0.0
      %1487 = vmatpush1.msra.mxu0 0.0
      %1488 = vmatprep.mubr.f32.mxu0 0.0
      %v1489 = vand.u32 %v853, 4294901760
      %1490 = vmatmul.mubr.f32.gmra.mrb[0].mxu0 %v1489
      %v1491 = vpop.f32.mrb[0].mxu0
      %v1492 = vadd.f32 %v1405, %v1491
      %v1493 = vpop.f32.mrb[0].mxu0
      %1494 = vdwg.mxu0
      %v1495 = vmul.f32 %v1492, 0.03125
      %v1496 = vadd.f32 %v1495, 1e-05
      %v1497 = vrsqrt.pop %v1496
      %v1498 = vmul.f32 %v852, %v1497
      %v1499 = vld [vmem:[%s1] sm:$0x1]
      %v1501 = vlaneseq
      %v1502 = vshrl.u32 %v1501, 7
      %v1503 = vsub.s32 0, %v1502
      %v1504 = vrot.slane %v1499, %v1503
      %v1506 = vmul.f32 %v1498, %v1504
      %v1507 = vld [vmem:[%s2] sm:$0x1]
      %v1509 = vlaneseq
      %v1510 = vshrl.u32 %v1509, 7
      %v1511 = vsub.s32 0, %v1510
      %v1512 = vrot.slane %v1507, %v1511
      %v1514 = vadd.f32 %v1506, %v1512
      %1515 = vst [vmem:[%s192] sm:$0xff] %v1514
      %p1516 = scmp.lt.s32.totalorder %s15, 3
      %s1517 = scalar_select %p1516, %s15, 3
      %s1518 = smul.addr %s1517, 8
      %s1519 = scalar_lea.vmem %s4, %s1518
      // Predicated region
      $region37: #{with_bias_layernorm.1} parent=35 // pred_check
        %p1520 = pneg %p122
      $region38: #{with_bias_layernorm.1} parent=35 // pred_check_branch
        %1522 = sbr.rel (%p1520) target = $region40
      $region39: #{with_bias_layernorm.1} parent=35 // pred_region
        _
      $region40: #{with_bias_layernorm.1} parent=35 // pred_fallthru
        _
    $region36: #{with_bias_layernorm.1} parent=5 // pred_fallthru
      _
    %p1523 = scmp.le.s32.totalorder 2, %s10
    // Predicated region
    $region41: #{with_bias_layernorm.1} parent=5 // pred_check
      %p1524 = pneg %p1523
    $region42: #{with_bias_layernorm.1} parent=5 // pred_check_branch
      %1526 = sbr.rel (%p1524) target = $region44
    $region43: #{with_bias_layernorm.1} parent=5 // pred_region
      %s1527 = ssub.s32 %s10, 2
      // Predicated region
      $region45: #{with_bias_layernorm.1} parent=43 // pred_check
        %p1528 = pneg %p128
      $region46: #{with_bias_layernorm.1} parent=43 // pred_check_branch
        %1530 = sbr.rel (%p1528) target = $region48
      $region47: #{with_bias_layernorm.1} parent=43 // pred_region
        %p1531 = scmp.lt.s32.totalorder %s16, 3
        %s1532 = scalar_select %p1531, %s16, 3
        %s1533 = smul.addr %s1532, 8
        %s1534 = scalar_lea.vmem %s4, %s1533
      $region48: #{with_bias_layernorm.1} parent=43 // pred_fallthru
        _
    $region44: #{with_bias_layernorm.1} parent=5 // pred_fallthru
      _
  $region6: #{with_bias_layernorm.1} parent=0 // loop_footer
    %s14 = sadd.s32 1, %s10
  $region7: #{with_bias_layernorm.1} parent=0 // loop_footer_branch
    %9 = sbr.rel target = $region3
  $region8: #{with_bias_layernorm.1} parent=0 // loop_exit
    _

</llo_original>
